<compile_context>
chip_gen: v7x
topology: tpu7x:2x2x1
jax: 0.10.0
libtpu: 0.0.40
codegen_flags: <defaults>
</compile_context>

<pallas_src>
import functools

import jax
import jax.numpy as jnp
import numpy as np
from jax import lax
from jax.experimental import pallas as pl
from jax.experimental.pallas import tpu as pltpu


# -----------------------------------------------------------------------------
# Fused Block kernel: all layers of one sample in a single pallas_call
# -----------------------------------------------------------------------------
def _make_block_kernel(C, H, W, mini, eps, n_layers):
    HW = H * W
    inv_n = 1.0 / float(C * HW)

    def kernel(x_ref, gamma_ref, beta_ref, w_ref, bias_ref, mask_ref,
               o_ref, act_ref):
        l = pl.program_id(1)

        # Initialize the VMEM-resident running activation at the first layer.
        @pl.when(l == 0)
        def _():
            act_ref[...] = x_ref[0].astype(jnp.float32)

        cur = act_ref[...]                                     # (C, HW) f32

        # ---- per-sample LayerNorm over the whole (C, H, W) slab -------------
        # One sample per block -> plain full reduction, single fused pass.
        s = jnp.sum(cur)
        sq = jnp.sum(cur * cur)
        mean = s * inv_n
        var = sq * inv_n - mean * mean
        rstd = lax.rsqrt(var + eps)
        xn = (cur - mean) * rstd
        xn = (xn * gamma_ref[0].astype(jnp.float32)
              + beta_ref[0].astype(jnp.float32))

        # ---- 3x3 SAME conv: 9 lane-rolled taps -> accumulating bf16 matmuls -
        # Accumulator starts from the conv bias (folds the bias add for free).
        acc = jnp.broadcast_to(bias_ref[0].astype(jnp.float32), (C, HW))
        for ky in range(3):
            for kx in range(3):
                k = ky * 3 + kx
                shift = -((ky - 1) * W + (kx - 1))
                if shift == 0:
                    t = xn                                     # center tap
                else:
                    # zero the wrap-around lanes with the precomputed mask
                    t = jnp.roll(xn, shift=shift, axis=1) * mask_ref[k:k + 1, :]
                acc = acc + jnp.dot(w_ref[0, k], t.astype(jnp.bfloat16),
                                    preferred_element_type=jnp.float32)

        act_ref[...] = jnp.maximum(acc, 0.0)                   # ReLU

        # residual add on mini-block boundaries: (j + mini - 1) % mini == 0
        @pl.when(((l + (mini - 1)) % mini) == 0)
        def _():
            act_ref[...] = act_ref[...] + x_ref[0].astype(jnp.float32)

        @pl.when(l == n_layers - 1)
        def _():
            o_ref[0] = act_ref[...].astype(o_ref.dtype)

    return kernel


# -----------------------------------------------------------------------------
# Block forward wrapper: channel pad + one-shot parameter packing
# -----------------------------------------------------------------------------
def block_forward(x, params, cfg):
    n_layers = cfg["n_layers"]
    mini = cfg["n_layers_mini_block"]
    c_in = cfg["n_channels_in"]
    C = cfg["n_channels_out"]
    eps = cfg["ln_eps"]

    B, _, H, W = x.shape
    HW = H * W
    L = n_layers

    # tmp = zeros(B, C_out, H, W); tmp[:, :C_in] = x[:, :C_out]
    tmp = jnp.zeros((B, C, H, W), x.dtype)
    tmp = tmp.at[:, :c_in, :, :].set(x[:, :C, :, :])
    x_packed = tmp.reshape(B, C, HW)

    # ---- pre-pack all per-layer parameters once ------------------------------
    gamma = params["ln_weight"].reshape(L, C, HW)                  # (L, C, HW) f32
    beta = params["ln_bias"].reshape(L, C, HW)                     # (L, C, HW) f32
    # (L, O, I, 3, 3) -> tap-major (L, 9, O, I), bf16 for the MXU (f32 acc).
    w9 = jnp.transpose(params["conv_weight"], (0, 3, 4, 1, 2)) \
            .reshape(L, 9, C, C).astype(jnp.bfloat16)              # (L, 9, C, C)
    bias = params["conv_bias"].reshape(L, C, 1)                    # (L, C, 1) f32

    # Static boundary masks for the 9 conv taps (hoisted out of the hot path).
    hh, ww = np.divmod(np.arange(HW), W)
    masks_np = np.zeros((9, HW), np.float32)
    for ky in range(3):
        for kx in range(3):
            sy, sx = ky - 1, kx - 1
            valid = ((hh + sy >= 0) & (hh + sy < H) &
                     (ww + sx >= 0) & (ww + sx < W))
            masks_np[ky * 3 + kx, :] = valid.astype(np.float32)
    masks = jnp.asarray(masks_np)

    kernel = _make_block_kernel(C=C, H=H, W=W, mini=mini, eps=eps, n_layers=L)

    flops = 2 * B * L * 9 * C * C * HW + 10 * B * L * C * HW
    bytes_accessed = (2 * x_packed.size * 4
                      + B * (gamma.size + beta.size + bias.size) * 4
                      + B * w9.size * 2 + masks.size * 4)

    out = pl.pallas_call(
        kernel,
        out_shape=jax.ShapeDtypeStruct((B, C, HW), x.dtype),
        grid=(B, L),
        in_specs=[
            pl.BlockSpec((1, C, HW), lambda b, l: (b, 0, 0)),       # padded input / residual
            pl.BlockSpec((1, C, HW), lambda b, l: (l, 0, 0)),       # LN gamma (per layer)
            pl.BlockSpec((1, C, HW), lambda b, l: (l, 0, 0)),       # LN beta  (per layer)
            pl.BlockSpec((1, 9, C, C), lambda b, l: (l, 0, 0, 0)),  # conv taps weight (bf16)
            pl.BlockSpec((1, C, 1), lambda b, l: (l, 0, 0)),        # conv bias
            pl.BlockSpec((9, HW), lambda b, l: (0, 0)),             # static boundary masks
        ],
        out_specs=pl.BlockSpec((1, C, HW), lambda b, l: (b, 0, 0)),
        scratch_shapes=[
            pltpu.VMEM((C, HW), jnp.float32),     # running activation (layer-resident)
        ],
        compiler_params=pltpu.CompilerParams(
            dimension_semantics=("parallel", "arbitrary")),
        cost_estimate=pl.CostEstimate(
            flops=flops, transcendentals=0, bytes_accessed=bytes_accessed),
    )(x_packed, gamma, beta, w9, bias, masks)

    return out.reshape(B, C, H, W)


# -----------------------------------------------------------------------------
# Pure-JAX reference (for verification)
# -----------------------------------------------------------------------------
def reference_forward(x, params, cfg):
    n_layers = cfg["n_layers"]
    mini = cfg["n_layers_mini_block"]
    c_in = cfg["n_channels_in"]
    c_out = cfg["n_channels_out"]
    eps = cfg["ln_eps"]

    B, _, H, W = x.shape
    tmp = jnp.zeros((B, c_out, H, W), x.dtype)
    tmp = tmp.at[:, :c_in, :, :].set(x[:, :c_out, :, :])
    cur = tmp
    for j in range(n_layers):
        mean = jnp.mean(cur, axis=(1, 2, 3), keepdims=True)
        var = jnp.mean((cur - mean) ** 2, axis=(1, 2, 3), keepdims=True)
        xn = (cur - mean) / jnp.sqrt(var + eps)
        xn = xn * params["ln_weight"][j][None] + params["ln_bias"][j][None]
        y = lax.conv_general_dilated(
            xn, params["conv_weight"][j], window_strides=(1, 1),
            padding=((1, 1), (1, 1)),
            dimension_numbers=("NCHW", "OIHW", "NCHW"))
        y = y + params["conv_bias"][j][None, :, None, None]
        cur = jnp.maximum(y, 0.0)
        if (j + (mini - 1)) % mini == 0:
            cur = cur + tmp
    return cur


# -----------------------------------------------------------------------------
# Main
# -----------------------------------------------------------------------------
if __name__ == "__main__":
    cfg = dict(
        n_layers=4,
        n_layers_mini_block=2,
        n_channels_in=2,
        n_channels_out=4,
        dropout=0.0,
        init_std=0.02,
        ln_eps=1e-5,
        image_size=16,
    )
    B = 2
    L = cfg["n_layers"]
    Cin, Cout = cfg["n_channels_in"], cfg["n_channels_out"]
    H = W = cfg["image_size"]

    key = jax.random.PRNGKey(0)
    k1, k2, k3, k4, kx = jax.random.split(key, 5)
    params = {
        "conv_weight": jax.random.normal(k1, (L, Cout, Cout, 3, 3),
                                         jnp.float32) * cfg["init_std"],
        "conv_bias": jax.random.normal(k2, (L, Cout), jnp.float32) * 0.01,
        "ln_weight": 1.0 + 0.05 * jax.random.normal(k3, (L, Cout, H, W),
                                                    jnp.float32),
        "ln_bias": 0.05 * jax.random.normal(k4, (L, Cout, H, W), jnp.float32),
    }
    x = jax.random.normal(kx, (B, Cin, H, W), jnp.float32)

    fwd = jax.jit(functools.partial(block_forward, cfg=cfg))
    out = jax.block_until_ready(fwd(x, params))

    ref = jax.block_until_ready(reference_forward(x, params, cfg))
    assert out.shape == (B, Cout, H, W), out.shape
    np.testing.assert_allclose(np.asarray(out), np.asarray(ref),
                               rtol=1e-2, atol=1e-2)

    print("KERNEL_OK")
</pallas_src>

<mosaic_0001>
module attributes {stable_mosaic.version = 11 : i64} {
  func.func @kernel(%arg0: i32, %arg1: i32, %arg2: memref<1x4x256xf32, #tpu.memory_space<vmem>>, %arg3: memref<1x4x256xf32, #tpu.memory_space<vmem>>, %arg4: memref<1x4x256xf32, #tpu.memory_space<vmem>>, %arg5: memref<1x9x4x4xbf16, #tpu.memory_space<vmem>>, %arg6: memref<1x4x1xf32, #tpu.memory_space<vmem>>, %arg7: memref<9x256xf32, #tpu.memory_space<vmem>>, %arg8: memref<1x4x256xf32, #tpu.memory_space<vmem>>, %arg9: memref<4x256xf32, #tpu.memory_space<vmem>>) attributes {dimension_semantics = [#tpu.dimension_semantics<parallel>, #tpu.dimension_semantics<arbitrary>], iteration_bounds = array<i64: 2, 4>, scalar_prefetch = 0 : i64, scratch_operands = 1 : i64, tpu.core_type = #tpu.core_type<tc>, window_params = [{transform_indices = @transform_0, window_bounds = array<i64: 1, 4, 256>}, {transform_indices = @transform_1, window_bounds = array<i64: 1, 4, 256>}, {transform_indices = @transform_2, window_bounds = array<i64: 1, 4, 256>}, {transform_indices = @transform_3, window_bounds = array<i64: 1, 9, 4, 4>}, {transform_indices = @transform_4, window_bounds = array<i64: 1, 4, 1>}, {pipeline_mode = #tpu.pipeline_mode<synchronous>, transform_indices = @transform_5, window_bounds = array<i64: 9, 256>}, {transform_indices = @transform_6, window_bounds = array<i64: 1, 4, 256>}]} {
    %c0_i32 = arith.constant 0 : i32
    %0 = arith.cmpi eq, %arg1, %c0_i32 : i32
    %1 = arith.extui %0 : i1 to i32
    %c0_i32_0 = arith.constant 0 : i32
    %2 = arith.cmpi ne, %1, %c0_i32_0 : i32
    scf.if %2 {
      %c0_79 = arith.constant 0 : index
      %c0_80 = arith.constant 0 : index
      %c0_81 = arith.constant 0 : index
      %146 = vector.load %arg2[%c0_79, %c0_80, %c0_81] : memref<1x4x256xf32, #tpu.memory_space<vmem>>, vector<1x4x256xf32>
      %147 = vector.shape_cast %146 : vector<1x4x256xf32> to vector<4x256xf32>
      %c0_82 = arith.constant 0 : index
      %c0_83 = arith.constant 0 : index
      %148 = vector.load %arg9[%c0_82, %c0_83] : memref<4x256xf32, #tpu.memory_space<vmem>>, vector<4x256xf32>
      tpu.vector_store %arg9[%c0_82, %c0_83], %147 {strides = array<i32>} : memref<4x256xf32, #tpu.memory_space<vmem>>, vector<4x256xf32>,
    } else {
    }
    %c0 = arith.constant 0 : index
    %c0_1 = arith.constant 0 : index
    %3 = vector.load %arg9[%c0, %c0_1] : memref<4x256xf32, #tpu.memory_space<vmem>>, vector<4x256xf32>
    %4 = vector.shape_cast %3 : vector<4x256xf32> to vector<1x4x256xf32>
    %cst = arith.constant dense<0.000000e+00> : vector<1xf32>
    %5 = vector.multi_reduction <add>, %4, %cst [1, 2] : vector<1x4x256xf32> to vector<1xf32>
    %6 = vector.shape_cast %5 : vector<1xf32> to vector<1x1x1xf32>
    %7 = vector.extract %6[0, 0, 0] : f32 from vector<1x1x1xf32>
    %8 = arith.mulf %3, %3 : vector<4x256xf32>
    %9 = vector.shape_cast %8 : vector<4x256xf32> to vector<1x4x256xf32>
    %cst_2 = arith.constant dense<0.000000e+00> : vector<1xf32>
    %10 = vector.multi_reduction <add>, %9, %cst_2 [1, 2] : vector<1x4x256xf32> to vector<1xf32>
    %11 = vector.shape_cast %10 : vector<1xf32> to vector<1x1x1xf32>
    %12 = vector.extract %11[0, 0, 0] : f32 from vector<1x1x1xf32>
    %cst_3 = arith.constant 9.765625E-4 : f32
    %13 = arith.mulf %7, %cst_3 : f32
    %cst_4 = arith.constant 9.765625E-4 : f32
    %14 = arith.mulf %12, %cst_4 : f32
    %15 = arith.mulf %13, %13 : f32
    %16 = arith.subf %14, %15 : f32
    %cst_5 = arith.constant 9.99999974E-6 : f32
    %17 = arith.addf %16, %cst_5 : f32
    %18 = math.rsqrt %17 : f32
    %19 = vector.broadcast %13 : f32 to vector<4x256xf32>
    %20 = arith.subf %3, %19 : vector<4x256xf32>
    %21 = vector.broadcast %18 : f32 to vector<4x256xf32>
    %22 = arith.mulf %20, %21 : vector<4x256xf32>
    %c0_6 = arith.constant 0 : index
    %c0_7 = arith.constant 0 : index
    %c0_8 = arith.constant 0 : index
    %23 = vector.load %arg3[%c0_6, %c0_7, %c0_8] : memref<1x4x256xf32, #tpu.memory_space<vmem>>, vector<1x4x256xf32>
    %24 = vector.shape_cast %23 : vector<1x4x256xf32> to vector<4x256xf32>
    %25 = arith.mulf %22, %24 : vector<4x256xf32>
    %c0_9 = arith.constant 0 : index
    %c0_10 = arith.constant 0 : index
    %c0_11 = arith.constant 0 : index
    %26 = vector.load %arg4[%c0_9, %c0_10, %c0_11] : memref<1x4x256xf32, #tpu.memory_space<vmem>>, vector<1x4x256xf32>
    %27 = vector.shape_cast %26 : vector<1x4x256xf32> to vector<4x256xf32>
    %28 = arith.addf %25, %27 : vector<4x256xf32>
    %c0_12 = arith.constant 0 : index
    %c0_13 = arith.constant 0 : index
    %c0_14 = arith.constant 0 : index
    %29 = vector.load %arg6[%c0_12, %c0_13, %c0_14] : memref<1x4x1xf32, #tpu.memory_space<vmem>>, vector<1x4x1xf32>
    %30 = vector.shape_cast %29 : vector<1x4x1xf32> to vector<4x1xf32>
    %31 = vector.shape_cast %30 : vector<4x1xf32> to vector<4x1xf32>
    %32 = vector.broadcast %31 : vector<4x1xf32> to vector<4x256xf32>
    %33 = vector.extract_strided_slice %28 {offsets = [0, 239], sizes = [4, 17], strides = [1, 1]} : vector<4x256xf32> to vector<4x17xf32>
    %34 = vector.extract_strided_slice %28 {offsets = [0, 0], sizes = [4, 239], strides = [1, 1]} : vector<4x256xf32> to vector<4x239xf32>
    %35 = tpu.concatenate %33, %34 in 1 : vector<4x17xf32>, vector<4x239xf32> -> vector<4x256xf32>
    %c0_15 = arith.constant 0 : index
    %c0_16 = arith.constant 0 : index
    %36 = vector.load %arg7[%c0_15, %c0_16] : memref<9x256xf32, #tpu.memory_space<vmem>>, vector<1x256xf32>
    %37 = vector.broadcast %36 : vector<1x256xf32> to vector<4x256xf32>
    %38 = arith.mulf %35, %37 : vector<4x256xf32>
    %c0_17 = arith.constant 0 : index
    %c0_18 = arith.constant 0 : index
    %c0_19 = arith.constant 0 : index
    %c0_20 = arith.constant 0 : index
    %39 = vector.load %arg5[%c0_17, %c0_18, %c0_19, %c0_20] : memref<1x9x4x4xbf16, #tpu.memory_space<vmem>>, vector<1x1x4x4xbf16>
    %40 = vector.shape_cast %39 : vector<1x1x4x4xbf16> to vector<4x4xbf16>
    %41 = arith.truncf %38 : vector<4x256xf32> to vector<4x256xbf16>
    %cst_21 = arith.constant dense<0.000000e+00> : vector<4x256xf32>
    %42 = tpu.matmul %40, %41, %cst_21 {dimension_numbers = #tpu.dot_dimension_numbers<[1], [0], [0], [1], [0, 0, 1, 1], [], []>} : vector<4x4xbf16>, vector<4x256xbf16>, vector<4x256xf32> -> vector<4x256xf32>
    %43 = arith.addf %32, %42 : vector<4x256xf32>
    %44 = vector.extract_strided_slice %28 {offsets = [0, 240], sizes = [4, 16], strides = [1, 1]} : vector<4x256xf32> to vector<4x16xf32>
    %45 = vector.extract_strided_slice %28 {offsets = [0, 0], sizes = [4, 240], strides = [1, 1]} : vector<4x256xf32> to vector<4x240xf32>
    %46 = tpu.concatenate %44, %45 in 1 : vector<4x16xf32>, vector<4x240xf32> -> vector<4x256xf32>
    %c1 = arith.constant 1 : index
    %c0_22 = arith.constant 0 : index
    %47 = vector.load %arg7[%c1, %c0_22] : memref<9x256xf32, #tpu.memory_space<vmem>>, vector<1x256xf32>
    %48 = vector.broadcast %47 : vector<1x256xf32> to vector<4x256xf32>
    %49 = arith.mulf %46, %48 : vector<4x256xf32>
    %c0_23 = arith.constant 0 : index
    %c1_24 = arith.constant 1 : index
    %c0_25 = arith.constant 0 : index
    %c0_26 = arith.constant 0 : index
    %50 = vector.load %arg5[%c0_23, %c1_24, %c0_25, %c0_26] : memref<1x9x4x4xbf16, #tpu.memory_space<vmem>>, vector<1x1x4x4xbf16>
    %51 = vector.shape_cast %50 : vector<1x1x4x4xbf16> to vector<4x4xbf16>
    %52 = arith.truncf %49 : vector<4x256xf32> to vector<4x256xbf16>
    %cst_27 = arith.constant dense<0.000000e+00> : vector<4x256xf32>
    %53 = tpu.matmul %51, %52, %cst_27 {dimension_numbers = #tpu.dot_dimension_numbers<[1], [0], [0], [1], [0, 0, 1, 1], [], []>} : vector<4x4xbf16>, vector<4x256xbf16>, vector<4x256xf32> -> vector<4x256xf32>
    %54 = arith.addf %43, %53 : vector<4x256xf32>
    %55 = vector.extract_strided_slice %28 {offsets = [0, 241], sizes = [4, 15], strides = [1, 1]} : vector<4x256xf32> to vector<4x15xf32>
    %56 = vector.extract_strided_slice %28 {offsets = [0, 0], sizes = [4, 241], strides = [1, 1]} : vector<4x256xf32> to vector<4x241xf32>
    %57 = tpu.concatenate %55, %56 in 1 : vector<4x15xf32>, vector<4x241xf32> -> vector<4x256xf32>
    %c2 = arith.constant 2 : index
    %c0_28 = arith.constant 0 : index
    %58 = vector.load %arg7[%c2, %c0_28] : memref<9x256xf32, #tpu.memory_space<vmem>>, vector<1x256xf32>
    %59 = vector.broadcast %58 : vector<1x256xf32> to vector<4x256xf32>
    %60 = arith.mulf %57, %59 : vector<4x256xf32>
    %c0_29 = arith.constant 0 : index
    %c2_30 = arith.constant 2 : index
    %c0_31 = arith.constant 0 : index
    %c0_32 = arith.constant 0 : index
    %61 = vector.load %arg5[%c0_29, %c2_30, %c0_31, %c0_32] : memref<1x9x4x4xbf16, #tpu.memory_space<vmem>>, vector<1x1x4x4xbf16>
    %62 = vector.shape_cast %61 : vector<1x1x4x4xbf16> to vector<4x4xbf16>
    %63 = arith.truncf %60 : vector<4x256xf32> to vector<4x256xbf16>
    %cst_33 = arith.constant dense<0.000000e+00> : vector<4x256xf32>
    %64 = tpu.matmul %62, %63, %cst_33 {dimension_numbers = #tpu.dot_dimension_numbers<[1], [0], [0], [1], [0, 0, 1, 1], [], []>} : vector<4x4xbf16>, vector<4x256xbf16>, vector<4x256xf32> -> vector<4x256xf32>
    %65 = arith.addf %54, %64 : vector<4x256xf32>
    %66 = vector.extract_strided_slice %28 {offsets = [0, 255], sizes = [4, 1], strides = [1, 1]} : vector<4x256xf32> to vector<4x1xf32>
    %67 = vector.extract_strided_slice %28 {offsets = [0, 0], sizes = [4, 255], strides = [1, 1]} : vector<4x256xf32> to vector<4x255xf32>
    %68 = tpu.concatenate %66, %67 in 1 : vector<4x1xf32>, vector<4x255xf32> -> vector<4x256xf32>
    %c3 = arith.constant 3 : index
    %c0_34 = arith.constant 0 : index
    %69 = vector.load %arg7[%c3, %c0_34] : memref<9x256xf32, #tpu.memory_space<vmem>>, vector<1x256xf32>
    %70 = vector.broadcast %69 : vector<1x256xf32> to vector<4x256xf32>
    %71 = arith.mulf %68, %70 : vector<4x256xf32>
    %c0_35 = arith.constant 0 : index
    %c3_36 = arith.constant 3 : index
    %c0_37 = arith.constant 0 : index
    %c0_38 = arith.constant 0 : index
    %72 = vector.load %arg5[%c0_35, %c3_36, %c0_37, %c0_38] : memref<1x9x4x4xbf16, #tpu.memory_space<vmem>>, vector<1x1x4x4xbf16>
    %73 = vector.shape_cast %72 : vector<1x1x4x4xbf16> to vector<4x4xbf16>
    %74 = arith.truncf %71 : vector<4x256xf32> to vector<4x256xbf16>
    %cst_39 = arith.constant dense<0.000000e+00> : vector<4x256xf32>
    %75 = tpu.matmul %73, %74, %cst_39 {dimension_numbers = #tpu.dot_dimension_numbers<[1], [0], [0], [1], [0, 0, 1, 1], [], []>} : vector<4x4xbf16>, vector<4x256xbf16>, vector<4x256xf32> -> vector<4x256xf32>
    %76 = arith.addf %65, %75 : vector<4x256xf32>
    %c0_40 = arith.constant 0 : index
    %c4 = arith.constant 4 : index
    %c0_41 = arith.constant 0 : index
    %c0_42 = arith.constant 0 : index
    %77 = vector.load %arg5[%c0_40, %c4, %c0_41, %c0_42] : memref<1x9x4x4xbf16, #tpu.memory_space<vmem>>, vector<1x1x4x4xbf16>
    %78 = vector.shape_cast %77 : vector<1x1x4x4xbf16> to vector<4x4xbf16>
    %79 = arith.truncf %28 : vector<4x256xf32> to vector<4x256xbf16>
    %cst_43 = arith.constant dense<0.000000e+00> : vector<4x256xf32>
    %80 = tpu.matmul %78, %79, %cst_43 {dimension_numbers = #tpu.dot_dimension_numbers<[1], [0], [0], [1], [0, 0, 1, 1], [], []>} : vector<4x4xbf16>, vector<4x256xbf16>, vector<4x256xf32> -> vector<4x256xf32>
    %81 = arith.addf %76, %80 : vector<4x256xf32>
    %82 = vector.extract_strided_slice %28 {offsets = [0, 1], sizes = [4, 255], strides = [1, 1]} : vector<4x256xf32> to vector<4x255xf32>
    %83 = vector.extract_strided_slice %28 {offsets = [0, 0], sizes = [4, 1], strides = [1, 1]} : vector<4x256xf32> to vector<4x1xf32>
    %84 = tpu.concatenate %82, %83 in 1 : vector<4x255xf32>, vector<4x1xf32> -> vector<4x256xf32>
    %c5 = arith.constant 5 : index
    %c0_44 = arith.constant 0 : index
    %85 = vector.load %arg7[%c5, %c0_44] : memref<9x256xf32, #tpu.memory_space<vmem>>, vector<1x256xf32>
    %86 = vector.broadcast %85 : vector<1x256xf32> to vector<4x256xf32>
    %87 = arith.mulf %84, %86 : vector<4x256xf32>
    %c0_45 = arith.constant 0 : index
    %c5_46 = arith.constant 5 : index
    %c0_47 = arith.constant 0 : index
    %c0_48 = arith.constant 0 : index
    %88 = vector.load %arg5[%c0_45, %c5_46, %c0_47, %c0_48] : memref<1x9x4x4xbf16, #tpu.memory_space<vmem>>, vector<1x1x4x4xbf16>
    %89 = vector.shape_cast %88 : vector<1x1x4x4xbf16> to vector<4x4xbf16>
    %90 = arith.truncf %87 : vector<4x256xf32> to vector<4x256xbf16>
    %cst_49 = arith.constant dense<0.000000e+00> : vector<4x256xf32>
    %91 = tpu.matmul %89, %90, %cst_49 {dimension_numbers = #tpu.dot_dimension_numbers<[1], [0], [0], [1], [0, 0, 1, 1], [], []>} : vector<4x4xbf16>, vector<4x256xbf16>, vector<4x256xf32> -> vector<4x256xf32>
    %92 = arith.addf %81, %91 : vector<4x256xf32>
    %93 = vector.extract_strided_slice %28 {offsets = [0, 15], sizes = [4, 241], strides = [1, 1]} : vector<4x256xf32> to vector<4x241xf32>
    %94 = vector.extract_strided_slice %28 {offsets = [0, 0], sizes = [4, 15], strides = [1, 1]} : vector<4x256xf32> to vector<4x15xf32>
    %95 = tpu.concatenate %93, %94 in 1 : vector<4x241xf32>, vector<4x15xf32> -> vector<4x256xf32>
    %c6 = arith.constant 6 : index
    %c0_50 = arith.constant 0 : index
    %96 = vector.load %arg7[%c6, %c0_50] : memref<9x256xf32, #tpu.memory_space<vmem>>, vector<1x256xf32>
    %97 = vector.broadcast %96 : vector<1x256xf32> to vector<4x256xf32>
    %98 = arith.mulf %95, %97 : vector<4x256xf32>
    %c0_51 = arith.constant 0 : index
    %c6_52 = arith.constant 6 : index
    %c0_53 = arith.constant 0 : index
    %c0_54 = arith.constant 0 : index
    %99 = vector.load %arg5[%c0_51, %c6_52, %c0_53, %c0_54] : memref<1x9x4x4xbf16, #tpu.memory_space<vmem>>, vector<1x1x4x4xbf16>
    %100 = vector.shape_cast %99 : vector<1x1x4x4xbf16> to vector<4x4xbf16>
    %101 = arith.truncf %98 : vector<4x256xf32> to vector<4x256xbf16>
    %cst_55 = arith.constant dense<0.000000e+00> : vector<4x256xf32>
    %102 = tpu.matmul %100, %101, %cst_55 {dimension_numbers = #tpu.dot_dimension_numbers<[1], [0], [0], [1], [0, 0, 1, 1], [], []>} : vector<4x4xbf16>, vector<4x256xbf16>, vector<4x256xf32> -> vector<4x256xf32>
    %103 = arith.addf %92, %102 : vector<4x256xf32>
    %104 = vector.extract_strided_slice %28 {offsets = [0, 16], sizes = [4, 240], strides = [1, 1]} : vector<4x256xf32> to vector<4x240xf32>
    %105 = vector.extract_strided_slice %28 {offsets = [0, 0], sizes = [4, 16], strides = [1, 1]} : vector<4x256xf32> to vector<4x16xf32>
    %106 = tpu.concatenate %104, %105 in 1 : vector<4x240xf32>, vector<4x16xf32> -> vector<4x256xf32>
    %c7 = arith.constant 7 : index
    %c0_56 = arith.constant 0 : index
    %107 = vector.load %arg7[%c7, %c0_56] : memref<9x256xf32, #tpu.memory_space<vmem>>, vector<1x256xf32>
    %108 = vector.broadcast %107 : vector<1x256xf32> to vector<4x256xf32>
    %109 = arith.mulf %106, %108 : vector<4x256xf32>
    %c0_57 = arith.constant 0 : index
    %c7_58 = arith.constant 7 : index
    %c0_59 = arith.constant 0 : index
    %c0_60 = arith.constant 0 : index
    %110 = vector.load %arg5[%c0_57, %c7_58, %c0_59, %c0_60] : memref<1x9x4x4xbf16, #tpu.memory_space<vmem>>, vector<1x1x4x4xbf16>
    %111 = vector.shape_cast %110 : vector<1x1x4x4xbf16> to vector<4x4xbf16>
    %112 = arith.truncf %109 : vector<4x256xf32> to vector<4x256xbf16>
    %cst_61 = arith.constant dense<0.000000e+00> : vector<4x256xf32>
    %113 = tpu.matmul %111, %112, %cst_61 {dimension_numbers = #tpu.dot_dimension_numbers<[1], [0], [0], [1], [0, 0, 1, 1], [], []>} : vector<4x4xbf16>, vector<4x256xbf16>, vector<4x256xf32> -> vector<4x256xf32>
    %114 = arith.addf %103, %113 : vector<4x256xf32>
    %115 = vector.extract_strided_slice %28 {offsets = [0, 17], sizes = [4, 239], strides = [1, 1]} : vector<4x256xf32> to vector<4x239xf32>
    %116 = vector.extract_strided_slice %28 {offsets = [0, 0], sizes = [4, 17], strides = [1, 1]} : vector<4x256xf32> to vector<4x17xf32>
    %117 = tpu.concatenate %115, %116 in 1 : vector<4x239xf32>, vector<4x17xf32> -> vector<4x256xf32>
    %c8 = arith.constant 8 : index
    %c0_62 = arith.constant 0 : index
    %118 = vector.load %arg7[%c8, %c0_62] : memref<9x256xf32, #tpu.memory_space<vmem>>, vector<1x256xf32>
    %119 = vector.broadcast %118 : vector<1x256xf32> to vector<4x256xf32>
    %120 = arith.mulf %117, %119 : vector<4x256xf32>
    %c0_63 = arith.constant 0 : index
    %c8_64 = arith.constant 8 : index
    %c0_65 = arith.constant 0 : index
    %c0_66 = arith.constant 0 : index
    %121 = vector.load %arg5[%c0_63, %c8_64, %c0_65, %c0_66] : memref<1x9x4x4xbf16, #tpu.memory_space<vmem>>, vector<1x1x4x4xbf16>
    %122 = vector.shape_cast %121 : vector<1x1x4x4xbf16> to vector<4x4xbf16>
    %123 = arith.truncf %120 : vector<4x256xf32> to vector<4x256xbf16>
    %cst_67 = arith.constant dense<0.000000e+00> : vector<4x256xf32>
    %124 = tpu.matmul %122, %123, %cst_67 {dimension_numbers = #tpu.dot_dimension_numbers<[1], [0], [0], [1], [0, 0, 1, 1], [], []>} : vector<4x4xbf16>, vector<4x256xbf16>, vector<4x256xf32> -> vector<4x256xf32>
    %125 = arith.addf %114, %124 : vector<4x256xf32>
    %cst_68 = arith.constant 0.000000e+00 : f32
    %126 = vector.broadcast %cst_68 : f32 to vector<4x256xf32>
    %127 = arith.maximumf %125, %126 : vector<4x256xf32>
    %c0_69 = arith.constant 0 : index
    %c0_70 = arith.constant 0 : index
    %128 = vector.load %arg9[%c0_69, %c0_70] : memref<4x256xf32, #tpu.memory_space<vmem>>, vector<4x256xf32>
    tpu.vector_store %arg9[%c0_69, %c0_70], %127 {strides = array<i32>} : memref<4x256xf32, #tpu.memory_space<vmem>>, vector<4x256xf32>,
    %c1_i32 = arith.constant 1 : i32
    %129 = arith.addi %arg1, %c1_i32 : i32
    %c2_i32 = arith.constant 2 : i32
    %c0_i32_71 = arith.constant 0 : i32
    %130 = arith.cmpi eq, %c2_i32, %c0_i32_71 : i32
    %c1_i32_72 = arith.constant 1 : i32
    %131 = arith.select %130, %c1_i32_72, %c2_i32 : i32
    %132 = arith.remsi %129, %131 : i32
    %c0_i32_73 = arith.constant 0 : i32
    %133 = arith.cmpi ne, %132, %c0_i32_73 : i32
    %c0_i32_74 = arith.constant 0 : i32
    %134 = arith.cmpi slt, %132, %c0_i32_74 : i32
    %c0_i32_75 = arith.constant 0 : i32
    %135 = arith.cmpi slt, %131, %c0_i32_75 : i32
    %136 = arith.xori %134, %135 : i1
    %137 = arith.andi %136, %133 : i1
    %138 = arith.addi %132, %131 : i32
    %139 = arith.select %137, %138, %132 : i32
    %c0_i32_76 = arith.constant 0 : i32
    %140 = arith.cmpi eq, %139, %c0_i32_76 : i32
    %141 = arith.extui %140 : i1 to i32
    %c0_i32_77 = arith.constant 0 : i32
    %142 = arith.cmpi ne, %141, %c0_i32_77 : i32
    scf.if %142 {
      %c0_79 = arith.constant 0 : index
      %c0_80 = arith.constant 0 : index
      %146 = vector.load %arg9[%c0_79, %c0_80] : memref<4x256xf32, #tpu.memory_space<vmem>>, vector<4x256xf32>
      %c0_81 = arith.constant 0 : index
      %c0_82 = arith.constant 0 : index
      %c0_83 = arith.constant 0 : index
      %147 = vector.load %arg2[%c0_81, %c0_82, %c0_83] : memref<1x4x256xf32, #tpu.memory_space<vmem>>, vector<1x4x256xf32>
      %148 = vector.shape_cast %147 : vector<1x4x256xf32> to vector<4x256xf32>
      %149 = arith.addf %146, %148 : vector<4x256xf32>
      %c0_84 = arith.constant 0 : index
      %c0_85 = arith.constant 0 : index
      %150 = vector.load %arg9[%c0_84, %c0_85] : memref<4x256xf32, #tpu.memory_space<vmem>>, vector<4x256xf32>
      tpu.vector_store %arg9[%c0_84, %c0_85], %149 {strides = array<i32>} : memref<4x256xf32, #tpu.memory_space<vmem>>, vector<4x256xf32>,
    } else {
    }
    %c3_i32 = arith.constant 3 : i32
    %143 = arith.cmpi eq, %arg1, %c3_i32 : i32
    %144 = arith.extui %143 : i1 to i32
    %c0_i32_78 = arith.constant 0 : i32
    %145 = arith.cmpi ne, %144, %c0_i32_78 : i32
    scf.if %145 {
      %c0_79 = arith.constant 0 : index
      %c0_80 = arith.constant 0 : index
      %146 = vector.load %arg9[%c0_79, %c0_80] : memref<4x256xf32, #tpu.memory_space<vmem>>, vector<4x256xf32>
      %c0_81 = arith.constant 0 : index
      %c0_82 = arith.constant 0 : index
      %c0_83 = arith.constant 0 : index
      %147 = vector.load %arg8[%c0_81, %c0_82, %c0_83] : memref<1x4x256xf32, #tpu.memory_space<vmem>>, vector<1x4x256xf32>
      %148 = vector.shape_cast %147 : vector<1x4x256xf32> to vector<4x256xf32>
      %149 = vector.shape_cast %146 : vector<4x256xf32> to vector<1x4x256xf32>
      tpu.vector_store %arg8[%c0_81, %c0_82, %c0_83], %149 {strides = array<i32>} : memref<1x4x256xf32, #tpu.memory_space<vmem>>, vector<1x4x256xf32>,
    } else {
    }
    return
  }
  func.func @transform_0(%arg0: i32, %arg1: i32) -> (i32, i32, i32) {
    %c0_i32 = arith.constant 0 : i32
    %c0_i32_0 = arith.constant 0 : i32
    %c0_i32_1 = arith.constant 0 : i32
    return %arg0, %c0_i32, %c0_i32_0 : i32, i32, i32
  }
  func.func @transform_1(%arg0: i32, %arg1: i32) -> (i32, i32, i32) {
    %c0_i32 = arith.constant 0 : i32
    %c0_i32_0 = arith.constant 0 : i32
    %c0_i32_1 = arith.constant 0 : i32
    return %arg1, %c0_i32, %c0_i32_0 : i32, i32, i32
  }
  func.func @transform_2(%arg0: i32, %arg1: i32) -> (i32, i32, i32) {
    %c0_i32 = arith.constant 0 : i32
    %c0_i32_0 = arith.constant 0 : i32
    %c0_i32_1 = arith.constant 0 : i32
    return %arg1, %c0_i32, %c0_i32_0 : i32, i32, i32
  }
  func.func @transform_3(%arg0: i32, %arg1: i32) -> (i32, i32, i32, i32) {
    %c0_i32 = arith.constant 0 : i32
    %c0_i32_0 = arith.constant 0 : i32
    %c0_i32_1 = arith.constant 0 : i32
    %c0_i32_2 = arith.constant 0 : i32
    return %arg1, %c0_i32, %c0_i32_0, %c0_i32_1 : i32, i32, i32, i32
  }
  func.func @transform_4(%arg0: i32, %arg1: i32) -> (i32, i32, i32) {
    %c0_i32 = arith.constant 0 : i32
    %c0_i32_0 = arith.constant 0 : i32
    %c0_i32_1 = arith.constant 0 : i32
    return %arg1, %c0_i32, %c0_i32_0 : i32, i32, i32
  }
  func.func @transform_5(%arg0: i32, %arg1: i32) -> (i32, i32) {
    %c0_i32 = arith.constant 0 : i32
    %c0_i32_0 = arith.constant 0 : i32
    %c0_i32_1 = arith.constant 0 : i32
    return %c0_i32, %c0_i32_0 : i32, i32
  }
  func.func @transform_6(%arg0: i32, %arg1: i32) -> (i32, i32, i32) {
    %c0_i32 = arith.constant 0 : i32
    %c0_i32_0 = arith.constant 0 : i32
    %c0_i32_1 = arith.constant 0 : i32
    return %arg0, %c0_i32, %c0_i32_0 : i32, i32, i32
  }
}

</mosaic_0001>

<llo_original>
// kernel: block_forward.1
$region0: #{block_forward.1}
  #allocation0 [shape = 'u32[]', space=smem, size = 0x4, offset = 0x4, fixed_abs, tag = 'smem constant byte address 0x4 - core index']
  #allocation1 [shape = 'u32[144,128]{1,0:T(1,128)}', space=vmem, size = 0x12000, scoped, tag = 'internal scratch']
  #allocation2 [shape = 'f32[4,256]{1,0:T(4,128)}', space=vmem, size = 0x1000, scoped, tag = 'scratch operand']
  %s0 = inlined_call_operand.vmem [shape: f32[2,4,256], index: 0, kind: input, shape index: {}]
  %s1 = inlined_call_operand.vmem [shape: f32[4,4,256], index: 1, kind: input, shape index: {}]
  %s2 = inlined_call_operand.vmem [shape: f32[4,4,256], index: 2, kind: input, shape index: {}]
  %s3 = inlined_call_operand.vmem [shape: bf16[4,9,4,4], index: 3, kind: input, shape index: {}]
  %s4 = inlined_call_operand.vmem [shape: f32[4,4,1], index: 4, kind: input, shape index: {}]
  %s5 = inlined_call_operand.vmem [shape: f32[9,256], index: 5, kind: input, shape index: {}]
  %s6 = inlined_call_operand.vmem [shape: f32[2,4,256], index: 6, kind: output, shape index: {}]
  %s7 = sld [smem:[#allocation0]]
  $region69: #{block_forward.1} parent=0
    _
  %s9 = ssub.s32 1, %s7
  %s10 = scalar_select 0, %s9, %s7
  loop: start=0, step=1, limit=10
  $region2: #{block_forward.1} parent=0 // loop_pre_header
    _
  $region3: #{block_forward.1} parent=0 // loop_header
    %s12 = sphi 0, %s16
    %p13 = scmp.ge.s32.totalorder %s12, 10
    %s19 = sphi 0, %s31
    %s20 = sphi 0, %s27
    %s21 = sphi 0, %s19
    %s22 = sphi 0, %s20
    %s23 = sphi 0, %s21
    %s24 = sphi 0, %s22
    %s34 = sphi 0, %s36
    %s37 = sphi 0, %s34
    %s38 = sphi 0, %s37
    %s54 = sphi 0, %s38
    %s60 = sphi 0, %s62
    %s63 = sphi 0, %s60
    %s64 = sphi 0, %s63
    %s80 = sphi 0, %s64
    %s86 = sphi 0, %s88
    %s89 = sphi 0, %s86
    %s90 = sphi 0, %s89
    %s106 = sphi 0, %s90
    %s112 = sphi 0, %s114
    %s115 = sphi 0, %s112
    %s116 = sphi 0, %s115
    %s132 = sphi 0, %s116
    %s138 = sphi 0, %s140
    %s141 = sphi 0, %s138
    %s142 = sphi 0, %s141
    %s158 = sphi 0, %s142
    %s162 = sphi 0, %s162
    %s164 = sphi 0, %s162
    %s165 = sphi 0, %s164
    %s179 = sphi 0, %s165
    %s185 = sphi 0, %s187
    %s188 = sphi 0, %s185
    %s189 = sphi 0, %s188
    %s205 = sphi 0, %s189
  $region4: #{block_forward.1} parent=0 // loop_header_branch
    %15 = sbr.rel (%p13) target = $region8
  $region5: #{block_forward.1} parent=0 // loop_body
    %s17 = ssub.s32 %s12, 1
    %s18 = ssub.s32 %s12, 2
    %s25 = sadd.s32 1, %s20
    %p26 = scmp.ge.s32.totalorder %s25, 4
    %s27 = scalar_select %p26, 0, %s25
    %s28 = sadd.s32 1, %s19
    %s29 = scalar_select %p26, %s28, %s19
    %p30 = scmp.ge.s32.totalorder %s29, 2
    %s31 = scalar_select %p30, 0, %s29
    %s32 = ssub.s32 %s19, %s31
    %p33 = scmp.eq.s32.totalorder %s32, 0
    %s35 = sadd.s32 %s34, 1
    %s36 = scalar_select %p33, %s34, %s35
    %p39 = pneg %p33
    %p40 = scmp.eq.s32.totalorder %s12, 7
    %p41 = por %p39, %p40
    %p42 = scmp.ne.s32.totalorder %s34, %s37
    %p43 = scmp.eq.s32.totalorder %s12, 0
    %p44 = por %p42, %p43
    %p45 = scmp.ne.s32.totalorder %s34, %s37
    %p46 = scmp.eq.s32.totalorder %s17, 7
    %p47 = por %p45, %p46
    %p48 = scmp.ne.s32.totalorder %s37, %s38
    %p49 = scmp.eq.s32.totalorder %s17, 0
    %p50 = por %p48, %p49
    %p51 = scmp.ne.s32.totalorder %s37, %s38
    %p52 = scmp.eq.s32.totalorder %s18, 7
    %p53 = por %p51, %p52
    %p55 = scmp.ne.s32.totalorder %s38, %s54
    %p56 = scmp.eq.s32.totalorder %s18, 0
    %p57 = por %p55, %p56
    %s58 = ssub.s32 %s20, %s27
    %p59 = scmp.eq.s32.totalorder %s58, 0
    %s61 = sadd.s32 %s60, 1
    %s62 = scalar_select %p59, %s60, %s61
    %p65 = pneg %p59
    %p66 = scmp.eq.s32.totalorder %s12, 7
    %p67 = por %p65, %p66
    %p68 = scmp.ne.s32.totalorder %s60, %s63
    %p69 = scmp.eq.s32.totalorder %s12, 0
    %p70 = por %p68, %p69
    %p71 = scmp.ne.s32.totalorder %s60, %s63
    %p72 = scmp.eq.s32.totalorder %s17, 7
    %p73 = por %p71, %p72
    %p74 = scmp.ne.s32.totalorder %s63, %s64
    %p75 = scmp.eq.s32.totalorder %s17, 0
    %p76 = por %p74, %p75
    %p77 = scmp.ne.s32.totalorder %s63, %s64
    %p78 = scmp.eq.s32.totalorder %s18, 7
    %p79 = por %p77, %p78
    %p81 = scmp.ne.s32.totalorder %s64, %s80
    %p82 = scmp.eq.s32.totalorder %s18, 0
    %p83 = por %p81, %p82
    %s84 = ssub.s32 %s20, %s27
    %p85 = scmp.eq.s32.totalorder %s84, 0
    %s87 = sadd.s32 %s86, 1
    %s88 = scalar_select %p85, %s86, %s87
    %p91 = pneg %p85
    %p92 = scmp.eq.s32.totalorder %s12, 7
    %p93 = por %p91, %p92
    %p94 = scmp.ne.s32.totalorder %s86, %s89
    %p95 = scmp.eq.s32.totalorder %s12, 0
    %p96 = por %p94, %p95
    %p97 = scmp.ne.s32.totalorder %s86, %s89
    %p98 = scmp.eq.s32.totalorder %s17, 7
    %p99 = por %p97, %p98
    %p100 = scmp.ne.s32.totalorder %s89, %s90
    %p101 = scmp.eq.s32.totalorder %s17, 0
    %p102 = por %p100, %p101
    %p103 = scmp.ne.s32.totalorder %s89, %s90
    %p104 = scmp.eq.s32.totalorder %s18, 7
    %p105 = por %p103, %p104
    %p107 = scmp.ne.s32.totalorder %s90, %s106
    %p108 = scmp.eq.s32.totalorder %s18, 0
    %p109 = por %p107, %p108
    %s110 = ssub.s32 %s20, %s27
    %p111 = scmp.eq.s32.totalorder %s110, 0
    %s113 = sadd.s32 %s112, 1
    %s114 = scalar_select %p111, %s112, %s113
    %p117 = pneg %p111
    %p118 = scmp.eq.s32.totalorder %s12, 7
    %p119 = por %p117, %p118
    %p120 = scmp.ne.s32.totalorder %s112, %s115
    %p121 = scmp.eq.s32.totalorder %s12, 0
    %p122 = por %p120, %p121
    %p123 = scmp.ne.s32.totalorder %s112, %s115
    %p124 = scmp.eq.s32.totalorder %s17, 7
    %p125 = por %p123, %p124
    %p126 = scmp.ne.s32.totalorder %s115, %s116
    %p127 = scmp.eq.s32.totalorder %s17, 0
    %p128 = por %p126, %p127
    %p129 = scmp.ne.s32.totalorder %s115, %s116
    %p130 = scmp.eq.s32.totalorder %s18, 7
    %p131 = por %p129, %p130
    %p133 = scmp.ne.s32.totalorder %s116, %s132
    %p134 = scmp.eq.s32.totalorder %s18, 0
    %p135 = por %p133, %p134
    %s136 = ssub.s32 %s20, %s27
    %p137 = scmp.eq.s32.totalorder %s136, 0
    %s139 = sadd.s32 %s138, 1
    %s140 = scalar_select %p137, %s138, %s139
    %p143 = pneg %p137
    %p144 = scmp.eq.s32.totalorder %s12, 7
    %p145 = por %p143, %p144
    %p146 = scmp.ne.s32.totalorder %s138, %s141
    %p147 = scmp.eq.s32.totalorder %s12, 0
    %p148 = por %p146, %p147
    %p149 = scmp.ne.s32.totalorder %s138, %s141
    %p150 = scmp.eq.s32.totalorder %s17, 7
    %p151 = por %p149, %p150
    %p152 = scmp.ne.s32.totalorder %s141, %s142
    %p153 = scmp.eq.s32.totalorder %s17, 0
    %p154 = por %p152, %p153
    %p155 = scmp.ne.s32.totalorder %s141, %s142
    %p156 = scmp.eq.s32.totalorder %s18, 7
    %p157 = por %p155, %p156
    %p159 = scmp.ne.s32.totalorder %s142, %s158
    %p160 = scmp.eq.s32.totalorder %s18, 0
    %p161 = por %p159, %p160
    %s163 = sadd.s32 %s162, 1
    %p166 = scmp.eq.s32.totalorder %s12, 7
    %p167 = scmp.ne.s32.totalorder %s162, %s164
    %p168 = scmp.eq.s32.totalorder %s12, 0
    %p169 = por %p167, %p168
    %p170 = scmp.ne.s32.totalorder %s162, %s164
    %p171 = scmp.eq.s32.totalorder %s17, 7
    %p172 = por %p170, %p171
    %p173 = scmp.ne.s32.totalorder %s164, %s165
    %p174 = scmp.eq.s32.totalorder %s17, 0
    %p175 = por %p173, %p174
    %p176 = scmp.ne.s32.totalorder %s164, %s165
    %p177 = scmp.eq.s32.totalorder %s18, 7
    %p178 = por %p176, %p177
    %p180 = scmp.ne.s32.totalorder %s165, %s179
    %p181 = scmp.eq.s32.totalorder %s18, 0
    %p182 = por %p180, %p181
    %s183 = ssub.s32 %s19, %s31
    %p184 = scmp.eq.s32.totalorder %s183, 0
    %s186 = sadd.s32 %s185, 1
    %s187 = scalar_select %p184, %s185, %s186
    %p190 = pneg %p184
    %p191 = scmp.eq.s32.totalorder %s12, 7
    %p192 = por %p190, %p191
    %p193 = scmp.ne.s32.totalorder %s185, %s188
    %p194 = scmp.eq.s32.totalorder %s12, 0
    %p195 = por %p193, %p194
    %p196 = scmp.ne.s32.totalorder %s185, %s188
    %p197 = scmp.eq.s32.totalorder %s17, 7
    %p198 = por %p196, %p197
    %p199 = scmp.ne.s32.totalorder %s188, %s189
    %p200 = scmp.eq.s32.totalorder %s17, 0
    %p201 = por %p199, %p200
    %p202 = scmp.ne.s32.totalorder %s188, %s189
    %p203 = scmp.eq.s32.totalorder %s18, 7
    %p204 = por %p202, %p203
    %p206 = scmp.ne.s32.totalorder %s189, %s205
    %p207 = scmp.eq.s32.totalorder %s18, 0
    %p208 = por %p206, %p207
    %p209 = scmp.le.s32.totalorder 1, %s12
    %p210 = scmp.lt.s32.totalorder %s12, 9
    %p211 = pnand %p209, %p210
    %p212 = pneg %p211
    // Predicated region
    $region9: #{block_forward.1} parent=5 // pred_check
      _
    $region10: #{block_forward.1} parent=5 // pred_check_branch
      %214 = sbr.rel (%p211) target = $region12
    $region11: #{block_forward.1} parent=5 // pred_region
      %s215 = ssub.s32 %s12, 1
      // Predicated region
      $region13: #{block_forward.1} parent=11 // pred_check
        %p216 = pneg %p175
      $region14: #{block_forward.1} parent=11 // pred_check_branch
        %218 = sbr.rel (%p216) target = $region16
      $region15: #{block_forward.1} parent=11 // pred_region
        _
      $region16: #{block_forward.1} parent=11 // pred_fallthru
        _
    $region12: #{block_forward.1} parent=5 // pred_fallthru
      _
    %p219 = scmp.lt.s32.totalorder %s12, 8
    // Predicated region
    $region17: #{block_forward.1} parent=5 // pred_check
      %p220 = pneg %p219
    $region18: #{block_forward.1} parent=5 // pred_check_branch
      %222 = sbr.rel (%p220) target = $region20
    $region19: #{block_forward.1} parent=5 // pred_region
      // Predicated region
      $region21: #{block_forward.1} parent=19 // pred_check
        %p223 = pneg %p44
      $region22: #{block_forward.1} parent=19 // pred_check_branch
        %225 = sbr.rel (%p223) target = $region24
      $region23: #{block_forward.1} parent=19 // pred_region
        %p226 = scmp.lt.s32.totalorder %s19, 1
        %s227 = scalar_select %p226, %s19, 1
        %s228 = smul.addr %s227, 2
        %s229 = smul.addr %s228, 4
        %s230 = scalar_lea.vmem %s0, %s229
      $region24: #{block_forward.1} parent=19 // pred_fallthru
        _
      // Predicated region
      $region25: #{block_forward.1} parent=19 // pred_check
        %p231 = pneg %p70
      $region26: #{block_forward.1} parent=19 // pred_check_branch
        %233 = sbr.rel (%p231) target = $region28
      $region27: #{block_forward.1} parent=19 // pred_region
        %p234 = scmp.lt.s32.totalorder %s20, 3
        %s235 = scalar_select %p234, %s20, 3
        %s236 = smul.addr %s235, 2
        %s237 = smul.addr %s236, 4
        %s238 = scalar_lea.vmem %s1, %s237
      $region28: #{block_forward.1} parent=19 // pred_fallthru
        _
      // Predicated region
      $region29: #{block_forward.1} parent=19 // pred_check
        %p239 = pneg %p96
      $region30: #{block_forward.1} parent=19 // pred_check_branch
        %241 = sbr.rel (%p239) target = $region32
      $region31: #{block_forward.1} parent=19 // pred_region
        %p242 = scmp.lt.s32.totalorder %s20, 3
        %s243 = scalar_select %p242, %s20, 3
        %s244 = smul.addr %s243, 2
        %s245 = smul.addr %s244, 4
        %s246 = scalar_lea.vmem %s2, %s245
      $region32: #{block_forward.1} parent=19 // pred_fallthru
        _
      // Predicated region
      $region33: #{block_forward.1} parent=19 // pred_check
        %p247 = pneg %p122
      $region34: #{block_forward.1} parent=19 // pred_check_branch
        %249 = sbr.rel (%p247) target = $region36
      $region35: #{block_forward.1} parent=19 // pred_region
        %p250 = scmp.lt.s32.totalorder %s20, 3
        %s251 = scalar_select %p250, %s20, 3
        %s252 = smul.addr %s251, 9
        %s253 = smul.addr %s252, 2
        %s254 = scalar_lea.vmem %s3, %s253
      $region36: #{block_forward.1} parent=19 // pred_fallthru
        _
      // Predicated region
      $region37: #{block_forward.1} parent=19 // pred_check
        %p255 = pneg %p148
      $region38: #{block_forward.1} parent=19 // pred_check_branch
        %257 = sbr.rel (%p255) target = $region40
      $region39: #{block_forward.1} parent=19 // pred_region
        %p258 = scmp.lt.s32.totalorder %s20, 3
        %s259 = scalar_select %p258, %s20, 3
        %s260 = smul.addr %s259, 4
        %s261 = scalar_lea.vmem %s4, %s260
      $region40: #{block_forward.1} parent=19 // pred_fallthru
        _
    $region20: #{block_forward.1} parent=5 // pred_fallthru
      _
    %p262 = scmp.le.s32.totalorder 1, %s12
    %p263 = scmp.lt.s32.totalorder %s12, 9
    %p264 = pnand %p262, %p263
    %p265 = pneg %p264
    // Predicated region
    $region41: #{block_forward.1} parent=5 // pred_check
      _
    $region42: #{block_forward.1} parent=5 // pred_check_branch
      %267 = sbr.rel (%p264) target = $region44
    $region43: #{block_forward.1} parent=5 // pred_region
      %s268 = ssub.s32 %s12, 1
      %p269 = scmp.lt.s32.totalorder %s21, 1
      %s270 = scalar_select %p269, %s21, 1
      %s271 = smul.addr %s270, 2
      %s272 = smul.addr %s271, 4
      %s273 = scalar_lea.vmem %s0, %s272
      %p274 = pneg %p50
      %p275 = pneg %p47
      %p276 = scmp.lt.s32.totalorder %s22, 3
      %s277 = scalar_select %p276, %s22, 3
      %s278 = smul.addr %s277, 2
      %s279 = smul.addr %s278, 4
      %s280 = scalar_lea.vmem %s1, %s279
      %p281 = pneg %p76
      %p282 = pneg %p73
      %p283 = scmp.lt.s32.totalorder %s22, 3
      %s284 = scalar_select %p283, %s22, 3
      %s285 = smul.addr %s284, 2
      %s286 = smul.addr %s285, 4
      %s287 = scalar_lea.vmem %s2, %s286
      %p288 = pneg %p102
      %p289 = pneg %p99
      %p290 = scmp.lt.s32.totalorder %s22, 3
      %s291 = scalar_select %p290, %s22, 3
      %s292 = smul.addr %s291, 9
      %s293 = smul.addr %s292, 2
      %s294 = scalar_lea.vmem %s3, %s293
      %p295 = pneg %p128
      %p296 = pneg %p125
      %p297 = scmp.lt.s32.totalorder %s22, 3
      %s298 = scalar_select %p297, %s22, 3
      %s299 = smul.addr %s298, 4
      %s300 = scalar_lea.vmem %s4, %s299
      %p301 = pneg %p154
      %p302 = pneg %p151
      %p303 = pneg %p175
      %p304 = pneg %p172
      %p305 = pneg %p201
      %p306 = pneg %p198
      %p307 = scmp.lt.s32.totalorder %s21, 1
      %s308 = scalar_select %p307, %s21, 1
      %s309 = smul.addr %s308, 2
      %s310 = smul.addr %s309, 4
      %s311 = scalar_lea.vmem %s6, %s310
      %p312 = scmp.lt.s32.totalorder %s21, 1
      %s313 = scalar_select %p312, %s21, 1
      %s314 = smul.addr %s313, 2
      %s315 = smul.addr %s314, 4
      %s316 = scalar_lea.vmem %s0, %s315
      %p317 = scmp.lt.s32.totalorder %s22, 3
      %s318 = scalar_select %p317, %s22, 3
      %s319 = smul.addr %s318, 2
      %s320 = smul.addr %s319, 4
      %s321 = scalar_lea.vmem %s1, %s320
      %p322 = scmp.lt.s32.totalorder %s22, 3
      %s323 = scalar_select %p322, %s22, 3
      %s324 = smul.addr %s323, 2
      %s325 = smul.addr %s324, 4
      %s326 = scalar_lea.vmem %s2, %s325
      %p327 = scmp.lt.s32.totalorder %s22, 3
      %s328 = scalar_select %p327, %s22, 3
      %s329 = smul.addr %s328, 9
      %s330 = smul.addr %s329, 2
      %s331 = scalar_lea.vmem %s3, %s330
      %p332 = scmp.lt.s32.totalorder %s22, 3
      %s333 = scalar_select %p332, %s22, 3
      %s334 = smul.addr %s333, 4
      %s335 = scalar_lea.vmem %s4, %s334
      %p336 = scmp.lt.s32.totalorder %s21, 1
      %s337 = scalar_select %p336, %s21, 1
      %s338 = smul.addr %s337, 2
      %s339 = smul.addr %s338, 4
      %s340 = scalar_lea.vmem %s6, %s339
      %p342 = scmp.eq.s32.totalorder %s22, 0
      // Predicated region
      $region45: #{block_forward.1} parent=43 // pred_check
        %p343 = pneg %p342
      $region46: #{block_forward.1} parent=43 // pred_check_branch
        %345 = sbr.rel (%p343) target = $region48
      $region47: #{block_forward.1} parent=43 // pred_region
        %v346 = vld [vmem:[%s316] sm:$0xff]
        %347 = vst [vmem:[#allocation2] sm:$0xff] %v346
      $region48: #{block_forward.1} parent=43 // pred_fallthru
        _
      %v348 = vld [vmem:[#allocation2] sm:$0xff]
      %v350 = vcombine.high %v348, %v348
      %vm352 = vcmask 1043456
      %v353 = vsel %vm352, %v348, 0.0
      %v354 = vsel %vm352, %v350, 0.0
      %v355 = vadd.f32 %v353, %v354
      %356 = vadd.xlane.f32.xlu0 %v355
      %v357 = vpop.xlane.xlu0 %356
      %v358 = vrot.slane %v357, 4
      %v359 = vadd.f32 %v357, %v358
      %v360 = vrot.slane %v359, 2
      %v361 = vadd.f32 %v359, %v360
      %v362 = vrot.slane %v361, 1
      %v363 = vadd.f32 %v361, %v362
      %s364 = vtos %v363
      %v365 = vmul.f32 %v348, %v348
      %v367 = vcombine.high %v365, %v365
      %v369 = vsel %vm352, %v365, 0.0
      %v370 = vsel %vm352, %v367, 0.0
      %v371 = vadd.f32 %v369, %v370
      %372 = vadd.xlane.f32.xlu0 %v371
      %v373 = vpop.xlane.xlu0 %372
      %v374 = vrot.slane %v373, 4
      %v375 = vadd.f32 %v373, %v374
      %v376 = vrot.slane %v375, 2
      %v377 = vadd.f32 %v375, %v376
      %v378 = vrot.slane %v377, 1
      %v379 = vadd.f32 %v377, %v378
      %s380 = vtos %v379
      %s381 = smul.f32 %s364, 0.0009765625
      %s382 = smul.f32 %s380, 0.0009765625
      %s383 = smul.f32 %s381, %s381
      %s384 = ssub.f32 %s382, %s383
      %s385 = sadd.f32 %s384, 1e-05
      %v386 = vstv %s385
      %v387 = vrsqrt.pop %v386
      %s388 = vtos %v387
      %v389 = vstv %s381
      %v390 = vsub.f32 %v348, %v389
      %v391 = vstv %s388
      %v392 = vmul.f32 %v390, %v391
      %v393 = vld [vmem:[%s321] sm:$0xff]
      %v394 = vmul.f32 %v392, %v393
      %v395 = vld [vmem:[%s326] sm:$0xff]
      %v396 = vadd.f32 %v394, %v395
      %v397 = vld [vmem:[%s335] sm:$0xf]
      %399 = vset.pattern.permute.xlu0 0
      %400 = vperm.xlu0 %399, %v397
      %v401 = vpop.permute.xlu0 %400
      %v404 = vcombine.high %v396, %v396
      %405 = vrot.lane.b32.xlu0 %v404, 17
      %v406 = vpop.permute.xlu0 %405
      %408 = vrot.lane.b32.xlu0 %v396, 17
      %v409 = vpop.permute.xlu0 %408
      %vm410 = vcmask 138240
      %v411 = vsel %vm410, %v409, %v406
      %v414 = vsel %vm410, %v406, %v409
      %v415 = vld [vmem:[%s5] ss:$8 sm:$0x3]
      %v417 = vlaneseq
      %v418 = vshrl.u32 %v417, 7
      %v419 = vsub.s32 0, %v418
      %v420 = vrot.slane %v415, %v419
      %v421 = vlaneseq
      %v422 = vshrl.u32 %v421, 7
      %v423 = vsub.s32 1, %v422
      %v424 = vrot.slane %v415, %v423
      %v427 = vmul.f32 %v414, %v420
      %v428 = vmul.f32 %v411, %v424
      %v429 = vld [vmem:[%s331] sm:$0x3]
      %v430 = vpack.c.bf16 %v427, %v427
      %v431 = vpack.c.bf16 %v428, %v428
      %vm432 = vcmask 31744
      %v434 = vsel %vm432, %v429, 0
      %vm436 = vcmask 1041408
      %v438 = vsel %vm436, %v430, 0
      %v441 = vsel %vm436, %v431, 0
      %443 = vmatprep.subr.bf16.mxu0 %v441
      %444 = vmatpush1.bf16.msra.mxu0 %v438
      %445 = vmatprep.subr.bf16.mxu0 0
      %446 = vmatpush1.bf16.msra.mxu0 0
      %447 = vmatprep.subr.bf16.mxu0 0
      %448 = vmatpush1.bf16.msra.mxu0 0
      %449 = vmatprep.subr.bf16.mxu0 0
      %450 = vmatpush1.bf16.msra.mxu0 0
      %451 = vmatprep.subr.bf16.mxu0 0
      %452 = vmatpush1.bf16.msra.mxu0 0
      %453 = vmatprep.subr.bf16.mxu0 0
      %454 = vmatpush1.bf16.msra.mxu0 0
      %455 = vmatprep.subr.bf16.mxu0 0
      %456 = vmatpush1.bf16.msra.mxu0 0
      %457 = vmatprep.subr.bf16.mxu0 0
      %458 = vmatpush1.bf16.msra.mxu0 0
      %459 = vmatprep.subr.bf16.mxu0 0
      %460 = vmatpush1.bf16.msra.mxu0 0
      %461 = vmatprep.subr.bf16.mxu0 0
      %462 = vmatpush1.bf16.msra.mxu0 0
      %463 = vmatprep.subr.bf16.mxu0 0
      %464 = vmatpush1.bf16.msra.mxu0 0
      %465 = vmatprep.subr.bf16.mxu0 0
      %466 = vmatpush1.bf16.msra.mxu0 0
      %467 = vmatprep.subr.bf16.mxu0 0
      %468 = vmatpush1.bf16.msra.mxu0 0
      %469 = vmatprep.subr.bf16.mxu0 0
      %470 = vmatpush1.bf16.msra.mxu0 0
      %471 = vmatprep.subr.bf16.mxu0 0
      %472 = vmatpush1.bf16.msra.mxu0 0
      %473 = vmatprep.subr.bf16.mxu0 0
      %474 = vmatpush1.bf16.msra.mxu0 0
      %475 = vmatprep.mubr.bf16.mxu0 0
      %476 = vmatmul.mubr.bf16.gmra.mrb[0].mxu0 %v434
      %v477 = vpop.f32.mrb[0].mxu0
      %v478 = vadd.f32 0.0, %v477
      %v479 = vpop.f32.mrb[0].mxu0
      %v480 = vadd.f32 0.0, %v479
      %v481 = vpop.f32.mrb[0].mxu0
      %v482 = vpop.f32.mrb[0].mxu0
      %483 = vdwg.mxu0
      %v484 = vadd.f32 %v401, %v478
      %v485 = vadd.f32 %v401, %v480
      %486 = vrot.lane.b32.xlu0 %v404, 16
      %v487 = vpop.permute.xlu0 %486
      %489 = vrot.lane.b32.xlu0 %v396, 16
      %v490 = vpop.permute.xlu0 %489
      %vm491 = vcmask 130048
      %v492 = vsel %vm491, %v490, %v487
      %v495 = vsel %vm491, %v487, %v490
      %s496 = scalar_lea.vmem %s5, 1
      %v497 = vld [vmem:[%s496] ss:$8 sm:$0x3]
      %v499 = vlaneseq
      %v500 = vshrl.u32 %v499, 7
      %v501 = vsub.s32 0, %v500
      %v502 = vrot.slane %v497, %v501
      %v503 = vlaneseq
      %v504 = vshrl.u32 %v503, 7
      %v505 = vsub.s32 1, %v504
      %v506 = vrot.slane %v497, %v505
      %v509 = vmul.f32 %v495, %v502
      %v510 = vmul.f32 %v492, %v506
      %s511 = scalar_lea.vmem %s331, 2
      %v512 = vld [vmem:[%s511] sm:$0x3]
      %v513 = vpack.c.bf16 %v509, %v509
      %v514 = vpack.c.bf16 %v510, %v510
      %v516 = vsel %vm432, %v512, 0
      %v519 = vsel %vm436, %v513, 0
      %v522 = vsel %vm436, %v514, 0
      %524 = vmatprep.subr.bf16.mxu0 %v522
      %525 = vmatpush1.bf16.msra.mxu0 %v519
      %526 = vmatprep.subr.bf16.mxu0 0
      %527 = vmatpush1.bf16.msra.mxu0 0
      %528 = vmatprep.subr.bf16.mxu0 0
      %529 = vmatpush1.bf16.msra.mxu0 0
      %530 = vmatprep.subr.bf16.mxu0 0
      %531 = vmatpush1.bf16.msra.mxu0 0
      %532 = vmatprep.subr.bf16.mxu0 0
      %533 = vmatpush1.bf16.msra.mxu0 0
      %534 = vmatprep.subr.bf16.mxu0 0
      %535 = vmatpush1.bf16.msra.mxu0 0
      %536 = vmatprep.subr.bf16.mxu0 0
      %537 = vmatpush1.bf16.msra.mxu0 0
      %538 = vmatprep.subr.bf16.mxu0 0
      %539 = vmatpush1.bf16.msra.mxu0 0
      %540 = vmatprep.subr.bf16.mxu0 0
      %541 = vmatpush1.bf16.msra.mxu0 0
      %542 = vmatprep.subr.bf16.mxu0 0
      %543 = vmatpush1.bf16.msra.mxu0 0
      %544 = vmatprep.subr.bf16.mxu0 0
      %545 = vmatpush1.bf16.msra.mxu0 0
      %546 = vmatprep.subr.bf16.mxu0 0
      %547 = vmatpush1.bf16.msra.mxu0 0
      %548 = vmatprep.subr.bf16.mxu0 0
      %549 = vmatpush1.bf16.msra.mxu0 0
      %550 = vmatprep.subr.bf16.mxu0 0
      %551 = vmatpush1.bf16.msra.mxu0 0
      %552 = vmatprep.subr.bf16.mxu0 0
      %553 = vmatpush1.bf16.msra.mxu0 0
      %554 = vmatprep.subr.bf16.mxu0 0
      %555 = vmatpush1.bf16.msra.mxu0 0
      %556 = vmatprep.mubr.bf16.mxu0 0
      %557 = vmatmul.mubr.bf16.gmra.mrb[0].mxu0 %v516
      %v558 = vpop.f32.mrb[0].mxu0
      %v559 = vadd.f32 0.0, %v558
      %v560 = vpop.f32.mrb[0].mxu0
      %v561 = vadd.f32 0.0, %v560
      %v562 = vpop.f32.mrb[0].mxu0
      %v563 = vpop.f32.mrb[0].mxu0
      %564 = vdwg.mxu0
      %v565 = vadd.f32 %v484, %v559
      %v566 = vadd.f32 %v485, %v561
      %567 = vrot.lane.b32.xlu0 %v404, 15
      %v568 = vpop.permute.xlu0 %567
      %570 = vrot.lane.b32.xlu0 %v396, 15
      %v571 = vpop.permute.xlu0 %570
      %vm572 = vcmask 121856
      %v573 = vsel %vm572, %v571, %v568
      %v576 = vsel %vm572, %v568, %v571
      %s577 = scalar_lea.vmem %s5, 2
      %v578 = vld [vmem:[%s577] ss:$8 sm:$0x3]
      %v580 = vlaneseq
      %v581 = vshrl.u32 %v580, 7
      %v582 = vsub.s32 0, %v581
      %v583 = vrot.slane %v578, %v582
      %v584 = vlaneseq
      %v585 = vshrl.u32 %v584, 7
      %v586 = vsub.s32 1, %v585
      %v587 = vrot.slane %v578, %v586
      %v590 = vmul.f32 %v576, %v583
      %v591 = vmul.f32 %v573, %v587
      %s592 = scalar_lea.vmem %s331, 4
      %v593 = vld [vmem:[%s592] sm:$0x3]
      %v594 = vpack.c.bf16 %v590, %v590
      %v595 = vpack.c.bf16 %v591, %v591
      %v597 = vsel %vm432, %v593, 0
      %v600 = vsel %vm436, %v594, 0
      %v603 = vsel %vm436, %v595, 0
      %605 = vmatprep.subr.bf16.mxu0 %v603
      %606 = vmatpush1.bf16.msra.mxu0 %v600
      %607 = vmatprep.subr.bf16.mxu0 0
      %608 = vmatpush1.bf16.msra.mxu0 0
      %609 = vmatprep.subr.bf16.mxu0 0
      %610 = vmatpush1.bf16.msra.mxu0 0
      %611 = vmatprep.subr.bf16.mxu0 0
      %612 = vmatpush1.bf16.msra.mxu0 0
      %613 = vmatprep.subr.bf16.mxu0 0
      %614 = vmatpush1.bf16.msra.mxu0 0
      %615 = vmatprep.subr.bf16.mxu0 0
      %616 = vmatpush1.bf16.msra.mxu0 0
      %617 = vmatprep.subr.bf16.mxu0 0
      %618 = vmatpush1.bf16.msra.mxu0 0
      %619 = vmatprep.subr.bf16.mxu0 0
      %620 = vmatpush1.bf16.msra.mxu0 0
      %621 = vmatprep.subr.bf16.mxu0 0
      %622 = vmatpush1.bf16.msra.mxu0 0
      %623 = vmatprep.subr.bf16.mxu0 0
      %624 = vmatpush1.bf16.msra.mxu0 0
      %625 = vmatprep.subr.bf16.mxu0 0
      %626 = vmatpush1.bf16.msra.mxu0 0
      %627 = vmatprep.subr.bf16.mxu0 0
      %628 = vmatpush1.bf16.msra.mxu0 0
      %629 = vmatprep.subr.bf16.mxu0 0
      %630 = vmatpush1.bf16.msra.mxu0 0
      %631 = vmatprep.subr.bf16.mxu0 0
      %632 = vmatpush1.bf16.msra.mxu0 0
      %633 = vmatprep.subr.bf16.mxu0 0
      %634 = vmatpush1.bf16.msra.mxu0 0
      %635 = vmatprep.subr.bf16.mxu0 0
      %636 = vmatpush1.bf16.msra.mxu0 0
      %637 = vmatprep.mubr.bf16.mxu0 0
      %638 = vmatmul.mubr.bf16.gmra.mrb[0].mxu0 %v597
      %v639 = vpop.f32.mrb[0].mxu0
      %v640 = vadd.f32 0.0, %v639
      %v641 = vpop.f32.mrb[0].mxu0
      %v642 = vadd.f32 0.0, %v641
      %v643 = vpop.f32.mrb[0].mxu0
      %v644 = vpop.f32.mrb[0].mxu0
      %645 = vdwg.mxu0
      %v646 = vadd.f32 %v565, %v640
      %v647 = vadd.f32 %v566, %v642
      %648 = vrot.lane.b32.xlu0 %v404, 1
      %v649 = vpop.permute.xlu0 %648
      %651 = vrot.lane.b32.xlu0 %v396, 1
      %v652 = vpop.permute.xlu0 %651
      %vm653 = vcmask 7168
      %v654 = vsel %vm653, %v652, %v649
      %v657 = vsel %vm653, %v649, %v652
      %s658 = scalar_lea.vmem %s5, 3
      %v659 = vld [vmem:[%s658] ss:$8 sm:$0x3]
      %v661 = vlaneseq
      %v662 = vshrl.u32 %v661, 7
      %v663 = vsub.s32 0, %v662
      %v664 = vrot.slane %v659, %v663
      %v665 = vlaneseq
      %v666 = vshrl.u32 %v665, 7
      %v667 = vsub.s32 1, %v666
      %v668 = vrot.slane %v659, %v667
      %v671 = vmul.f32 %v657, %v664
      %v672 = vmul.f32 %v654, %v668
      %s673 = scalar_lea.vmem %s331, 6
      %v674 = vld [vmem:[%s673] sm:$0x3]
      %v675 = vpack.c.bf16 %v671, %v671
      %v676 = vpack.c.bf16 %v672, %v672
      %v678 = vsel %vm432, %v674, 0
      %v681 = vsel %vm436, %v675, 0
      %v684 = vsel %vm436, %v676, 0
      %686 = vmatprep.subr.bf16.mxu0 %v684
      %687 = vmatpush1.bf16.msra.mxu0 %v681
      %688 = vmatprep.subr.bf16.mxu0 0
      %689 = vmatpush1.bf16.msra.mxu0 0
      %690 = vmatprep.subr.bf16.mxu0 0
      %691 = vmatpush1.bf16.msra.mxu0 0
      %692 = vmatprep.subr.bf16.mxu0 0
      %693 = vmatpush1.bf16.msra.mxu0 0
      %694 = vmatprep.subr.bf16.mxu0 0
      %695 = vmatpush1.bf16.msra.mxu0 0
      %696 = vmatprep.subr.bf16.mxu0 0
      %697 = vmatpush1.bf16.msra.mxu0 0
      %698 = vmatprep.subr.bf16.mxu0 0
      %699 = vmatpush1.bf16.msra.mxu0 0
      %700 = vmatprep.subr.bf16.mxu0 0
      %701 = vmatpush1.bf16.msra.mxu0 0
      %702 = vmatprep.subr.bf16.mxu0 0
      %703 = vmatpush1.bf16.msra.mxu0 0
      %704 = vmatprep.subr.bf16.mxu0 0
      %705 = vmatpush1.bf16.msra.mxu0 0
      %706 = vmatprep.subr.bf16.mxu0 0
      %707 = vmatpush1.bf16.msra.mxu0 0
      %708 = vmatprep.subr.bf16.mxu0 0
      %709 = vmatpush1.bf16.msra.mxu0 0
      %710 = vmatprep.subr.bf16.mxu0 0
      %711 = vmatpush1.bf16.msra.mxu0 0
      %712 = vmatprep.subr.bf16.mxu0 0
      %713 = vmatpush1.bf16.msra.mxu0 0
      %714 = vmatprep.subr.bf16.mxu0 0
      %715 = vmatpush1.bf16.msra.mxu0 0
      %716 = vmatprep.subr.bf16.mxu0 0
      %717 = vmatpush1.bf16.msra.mxu0 0
      %718 = vmatprep.mubr.bf16.mxu0 0
      %719 = vmatmul.mubr.bf16.gmra.mrb[0].mxu0 %v678
      %v720 = vpop.f32.mrb[0].mxu0
      %v721 = vadd.f32 0.0, %v720
      %v722 = vpop.f32.mrb[0].mxu0
      %v723 = vadd.f32 0.0, %v722
      %v724 = vpop.f32.mrb[0].mxu0
      %v725 = vpop.f32.mrb[0].mxu0
      %726 = vdwg.mxu0
      %v727 = vadd.f32 %v646, %v721
      %v728 = vadd.f32 %v647, %v723
      %s729 = scalar_lea.vmem %s331, 8
      %v730 = vld [vmem:[%s729] sm:$0x3]
      %v732 = vpack.c.bf16 %v396, %v396
      %v733 = vpack.c.bf16 %v404, %v404
      %v735 = vsel %vm432, %v730, 0
      %v738 = vsel %vm436, %v732, 0
      %v741 = vsel %vm436, %v733, 0
      %743 = vmatprep.subr.bf16.mxu0 %v741
      %744 = vmatpush1.bf16.msra.mxu0 %v738
      %745 = vmatprep.subr.bf16.mxu0 0
      %746 = vmatpush1.bf16.msra.mxu0 0
      %747 = vmatprep.subr.bf16.mxu0 0
      %748 = vmatpush1.bf16.msra.mxu0 0
      %749 = vmatprep.subr.bf16.mxu0 0
      %750 = vmatpush1.bf16.msra.mxu0 0
      %751 = vmatprep.subr.bf16.mxu0 0
      %752 = vmatpush1.bf16.msra.mxu0 0
      %753 = vmatprep.subr.bf16.mxu0 0
      %754 = vmatpush1.bf16.msra.mxu0 0
      %755 = vmatprep.subr.bf16.mxu0 0
      %756 = vmatpush1.bf16.msra.mxu0 0
      %757 = vmatprep.subr.bf16.mxu0 0
      %758 = vmatpush1.bf16.msra.mxu0 0
      %759 = vmatprep.subr.bf16.mxu0 0
      %760 = vmatpush1.bf16.msra.mxu0 0
      %761 = vmatprep.subr.bf16.mxu0 0
      %762 = vmatpush1.bf16.msra.mxu0 0
      %763 = vmatprep.subr.bf16.mxu0 0
      %764 = vmatpush1.bf16.msra.mxu0 0
      %765 = vmatprep.subr.bf16.mxu0 0
      %766 = vmatpush1.bf16.msra.mxu0 0
      %767 = vmatprep.subr.bf16.mxu0 0
      %768 = vmatpush1.bf16.msra.mxu0 0
      %769 = vmatprep.subr.bf16.mxu0 0
      %770 = vmatpush1.bf16.msra.mxu0 0
      %771 = vmatprep.subr.bf16.mxu0 0
      %772 = vmatpush1.bf16.msra.mxu0 0
      %773 = vmatprep.subr.bf16.mxu0 0
      %774 = vmatpush1.bf16.msra.mxu0 0
      %775 = vmatprep.mubr.bf16.mxu0 0
      %776 = vmatmul.mubr.bf16.gmra.mrb[0].mxu0 %v735
      %v777 = vpop.f32.mrb[0].mxu0
      %v778 = vadd.f32 0.0, %v777
      %v779 = vpop.f32.mrb[0].mxu0
      %v780 = vadd.f32 0.0, %v779
      %v781 = vpop.f32.mrb[0].mxu0
      %v782 = vpop.f32.mrb[0].mxu0
      %783 = vdwg.mxu0
      %v784 = vadd.f32 %v727, %v778
      %v785 = vadd.f32 %v728, %v780
      %786 = vrot.lane.b32.xlu0 %v396, 127
      %v787 = vpop.permute.xlu0 %786
      %788 = vrot.lane.b32.xlu0 %v404, 127
      %v789 = vpop.permute.xlu0 %788
      %vm790 = vcmask 1039360
      %v791 = vsel %vm790, %v787, %v789
      %v795 = vsel %vm790, %v789, %v787
      %s796 = scalar_lea.vmem %s5, 5
      %v797 = vld [vmem:[%s796] ss:$8 sm:$0x3]
      %v799 = vlaneseq
      %v800 = vshrl.u32 %v799, 7
      %v801 = vsub.s32 0, %v800
      %v802 = vrot.slane %v797, %v801
      %v803 = vlaneseq
      %v804 = vshrl.u32 %v803, 7
      %v805 = vsub.s32 1, %v804
      %v806 = vrot.slane %v797, %v805
      %v809 = vmul.f32 %v791, %v802
      %v810 = vmul.f32 %v795, %v806
      %s811 = scalar_lea.vmem %s331, 10
      %v812 = vld [vmem:[%s811] sm:$0x3]
      %v813 = vpack.c.bf16 %v809, %v809
      %v814 = vpack.c.bf16 %v810, %v810
      %v816 = vsel %vm432, %v812, 0
      %v819 = vsel %vm436, %v813, 0
      %v822 = vsel %vm436, %v814, 0
      %824 = vmatprep.subr.bf16.mxu0 %v822
      %825 = vmatpush1.bf16.msra.mxu0 %v819
      %826 = vmatprep.subr.bf16.mxu0 0
      %827 = vmatpush1.bf16.msra.mxu0 0
      %828 = vmatprep.subr.bf16.mxu0 0
      %829 = vmatpush1.bf16.msra.mxu0 0
      %830 = vmatprep.subr.bf16.mxu0 0
      %831 = vmatpush1.bf16.msra.mxu0 0
      %832 = vmatprep.subr.bf16.mxu0 0
      %833 = vmatpush1.bf16.msra.mxu0 0
      %834 = vmatprep.subr.bf16.mxu0 0
      %835 = vmatpush1.bf16.msra.mxu0 0
      %836 = vmatprep.subr.bf16.mxu0 0
      %837 = vmatpush1.bf16.msra.mxu0 0
      %838 = vmatprep.subr.bf16.mxu0 0
      %839 = vmatpush1.bf16.msra.mxu0 0
      %840 = vmatprep.subr.bf16.mxu0 0
      %841 = vmatpush1.bf16.msra.mxu0 0
      %842 = vmatprep.subr.bf16.mxu0 0
      %843 = vmatpush1.bf16.msra.mxu0 0
      %844 = vmatprep.subr.bf16.mxu0 0
      %845 = vmatpush1.bf16.msra.mxu0 0
      %846 = vmatprep.subr.bf16.mxu0 0
      %847 = vmatpush1.bf16.msra.mxu0 0
      %848 = vmatprep.subr.bf16.mxu0 0
      %849 = vmatpush1.bf16.msra.mxu0 0
      %850 = vmatprep.subr.bf16.mxu0 0
      %851 = vmatpush1.bf16.msra.mxu0 0
      %852 = vmatprep.subr.bf16.mxu0 0
      %853 = vmatpush1.bf16.msra.mxu0 0
      %854 = vmatprep.subr.bf16.mxu0 0
      %855 = vmatpush1.bf16.msra.mxu0 0
      %856 = vmatprep.mubr.bf16.mxu0 0
      %857 = vmatmul.mubr.bf16.gmra.mrb[0].mxu0 %v816
      %v858 = vpop.f32.mrb[0].mxu0
      %v859 = vadd.f32 0.0, %v858
      %v860 = vpop.f32.mrb[0].mxu0
      %v861 = vadd.f32 0.0, %v860
      %v862 = vpop.f32.mrb[0].mxu0
      %v863 = vpop.f32.mrb[0].mxu0
      %864 = vdwg.mxu0
      %v865 = vadd.f32 %v784, %v859
      %v866 = vadd.f32 %v785, %v861
      %867 = vrot.lane.b32.xlu0 %v396, 113
      %v868 = vpop.permute.xlu0 %867
      %869 = vrot.lane.b32.xlu0 %v404, 113
      %v870 = vpop.permute.xlu0 %869
      %vm871 = vcmask 924672
      %v872 = vsel %vm871, %v868, %v870
      %v876 = vsel %vm871, %v870, %v868
      %s877 = scalar_lea.vmem %s5, 6
      %v878 = vld [vmem:[%s877] ss:$8 sm:$0x3]
      %v880 = vlaneseq
      %v881 = vshrl.u32 %v880, 7
      %v882 = vsub.s32 0, %v881
      %v883 = vrot.slane %v878, %v882
      %v884 = vlaneseq
      %v885 = vshrl.u32 %v884, 7
      %v886 = vsub.s32 1, %v885
      %v887 = vrot.slane %v878, %v886
      %v890 = vmul.f32 %v872, %v883
      %v891 = vmul.f32 %v876, %v887
      %s892 = scalar_lea.vmem %s331, 12
      %v893 = vld [vmem:[%s892] sm:$0x3]
      %v894 = vpack.c.bf16 %v890, %v890
      %v895 = vpack.c.bf16 %v891, %v891
      %v897 = vsel %vm432, %v893, 0
      %v900 = vsel %vm436, %v894, 0
      %v903 = vsel %vm436, %v895, 0
      %905 = vmatprep.subr.bf16.mxu0 %v903
      %906 = vmatpush1.bf16.msra.mxu0 %v900
      %907 = vmatprep.subr.bf16.mxu0 0
      %908 = vmatpush1.bf16.msra.mxu0 0
      %909 = vmatprep.subr.bf16.mxu0 0
      %910 = vmatpush1.bf16.msra.mxu0 0
      %911 = vmatprep.subr.bf16.mxu0 0
      %912 = vmatpush1.bf16.msra.mxu0 0
      %913 = vmatprep.subr.bf16.mxu0 0
      %914 = vmatpush1.bf16.msra.mxu0 0
      %915 = vmatprep.subr.bf16.mxu0 0
      %916 = vmatpush1.bf16.msra.mxu0 0
      %917 = vmatprep.subr.bf16.mxu0 0
      %918 = vmatpush1.bf16.msra.mxu0 0
      %919 = vmatprep.subr.bf16.mxu0 0
      %920 = vmatpush1.bf16.msra.mxu0 0
      %921 = vmatprep.subr.bf16.mxu0 0
      %922 = vmatpush1.bf16.msra.mxu0 0
      %923 = vmatprep.subr.bf16.mxu0 0
      %924 = vmatpush1.bf16.msra.mxu0 0
      %925 = vmatprep.subr.bf16.mxu0 0
      %926 = vmatpush1.bf16.msra.mxu0 0
      %927 = vmatprep.subr.bf16.mxu0 0
      %928 = vmatpush1.bf16.msra.mxu0 0
      %929 = vmatprep.subr.bf16.mxu0 0
      %930 = vmatpush1.bf16.msra.mxu0 0
      %931 = vmatprep.subr.bf16.mxu0 0
      %932 = vmatpush1.bf16.msra.mxu0 0
      %933 = vmatprep.subr.bf16.mxu0 0
      %934 = vmatpush1.bf16.msra.mxu0 0
      %935 = vmatprep.subr.bf16.mxu0 0
      %936 = vmatpush1.bf16.msra.mxu0 0
      %937 = vmatprep.mubr.bf16.mxu0 0
      %938 = vmatmul.mubr.bf16.gmra.mrb[0].mxu0 %v897
      %v939 = vpop.f32.mrb[0].mxu0
      %v940 = vadd.f32 0.0, %v939
      %v941 = vpop.f32.mrb[0].mxu0
      %v942 = vadd.f32 0.0, %v941
      %v943 = vpop.f32.mrb[0].mxu0
      %v944 = vpop.f32.mrb[0].mxu0
      %945 = vdwg.mxu0
      %v946 = vadd.f32 %v865, %v940
      %v947 = vadd.f32 %v866, %v942
      %948 = vrot.lane.b32.xlu0 %v396, 112
      %v949 = vpop.permute.xlu0 %948
      %950 = vrot.lane.b32.xlu0 %v404, 112
      %v951 = vpop.permute.xlu0 %950
      %vm952 = vcmask 916480
      %v953 = vsel %vm952, %v949, %v951
      %v957 = vsel %vm952, %v951, %v949
      %s958 = scalar_lea.vmem %s5, 7
      %v959 = vld [vmem:[%s958] ss:$8 sm:$0x3]
      %v961 = vlaneseq
      %v962 = vshrl.u32 %v961, 7
      %v963 = vsub.s32 0, %v962
      %v964 = vrot.slane %v959, %v963
      %v965 = vlaneseq
      %v966 = vshrl.u32 %v965, 7
      %v967 = vsub.s32 1, %v966
      %v968 = vrot.slane %v959, %v967
      %v971 = vmul.f32 %v953, %v964
      %v972 = vmul.f32 %v957, %v968
      %s973 = scalar_lea.vmem %s331, 14
      %v974 = vld [vmem:[%s973] sm:$0x3]
      %v975 = vpack.c.bf16 %v971, %v971
      %v976 = vpack.c.bf16 %v972, %v972
      %v978 = vsel %vm432, %v974, 0
      %v981 = vsel %vm436, %v975, 0
      %v984 = vsel %vm436, %v976, 0
      %986 = vmatprep.subr.bf16.mxu0 %v984
      %987 = vmatpush1.bf16.msra.mxu0 %v981
      %988 = vmatprep.subr.bf16.mxu0 0
      %989 = vmatpush1.bf16.msra.mxu0 0
      %990 = vmatprep.subr.bf16.mxu0 0
      %991 = vmatpush1.bf16.msra.mxu0 0
      %992 = vmatprep.subr.bf16.mxu0 0
      %993 = vmatpush1.bf16.msra.mxu0 0
      %994 = vmatprep.subr.bf16.mxu0 0
      %995 = vmatpush1.bf16.msra.mxu0 0
      %996 = vmatprep.subr.bf16.mxu0 0
      %997 = vmatpush1.bf16.msra.mxu0 0
      %998 = vmatprep.subr.bf16.mxu0 0
      %999 = vmatpush1.bf16.msra.mxu0 0
      %1000 = vmatprep.subr.bf16.mxu0 0
      %1001 = vmatpush1.bf16.msra.mxu0 0
      %1002 = vmatprep.subr.bf16.mxu0 0
      %1003 = vmatpush1.bf16.msra.mxu0 0
      %1004 = vmatprep.subr.bf16.mxu0 0
      %1005 = vmatpush1.bf16.msra.mxu0 0
      %1006 = vmatprep.subr.bf16.mxu0 0
      %1007 = vmatpush1.bf16.msra.mxu0 0
      %1008 = vmatprep.subr.bf16.mxu0 0
      %1009 = vmatpush1.bf16.msra.mxu0 0
      %1010 = vmatprep.subr.bf16.mxu0 0
      %1011 = vmatpush1.bf16.msra.mxu0 0
      %1012 = vmatprep.subr.bf16.mxu0 0
      %1013 = vmatpush1.bf16.msra.mxu0 0
      %1014 = vmatprep.subr.bf16.mxu0 0
      %1015 = vmatpush1.bf16.msra.mxu0 0
      %1016 = vmatprep.subr.bf16.mxu0 0
      %1017 = vmatpush1.bf16.msra.mxu0 0
      %1018 = vmatprep.mubr.bf16.mxu0 0
      %1019 = vmatmul.mubr.bf16.gmra.mrb[0].mxu0 %v978
      %v1020 = vpop.f32.mrb[0].mxu0
      %v1021 = vadd.f32 0.0, %v1020
      %v1022 = vpop.f32.mrb[0].mxu0
      %v1023 = vadd.f32 0.0, %v1022
      %v1024 = vpop.f32.mrb[0].mxu0
      %v1025 = vpop.f32.mrb[0].mxu0
      %1026 = vdwg.mxu0
      %v1027 = vadd.f32 %v946, %v1021
      %v1028 = vadd.f32 %v947, %v1023
      %1029 = vrot.lane.b32.xlu0 %v396, 111
      %v1030 = vpop.permute.xlu0 %1029
      %1031 = vrot.lane.b32.xlu0 %v404, 111
      %v1032 = vpop.permute.xlu0 %1031
      %vm1033 = vcmask 908288
      %v1034 = vsel %vm1033, %v1030, %v1032
      %v1038 = vsel %vm1033, %v1032, %v1030
      %s1039 = scalar_lea.vmem %s5, 16
      %v1040 = vld [vmem:[%s1039] ss:$8 sm:$0x3]
      %v1042 = vlaneseq
      %v1043 = vshrl.u32 %v1042, 7
      %v1044 = vsub.s32 0, %v1043
      %v1045 = vrot.slane %v1040, %v1044
      %v1046 = vlaneseq
      %v1047 = vshrl.u32 %v1046, 7
      %v1048 = vsub.s32 1, %v1047
      %v1049 = vrot.slane %v1040, %v1048
      %v1052 = vmul.f32 %v1034, %v1045
      %v1053 = vmul.f32 %v1038, %v1049
      %s1054 = scalar_lea.vmem %s331, 16
      %v1055 = vld [vmem:[%s1054] sm:$0x3]
      %v1056 = vpack.c.bf16 %v1052, %v1052
      %v1057 = vpack.c.bf16 %v1053, %v1053
      %v1059 = vsel %vm432, %v1055, 0
      %v1062 = vsel %vm436, %v1056, 0
      %v1065 = vsel %vm436, %v1057, 0
      %1067 = vmatprep.subr.bf16.mxu0 %v1065
      %1068 = vmatpush1.bf16.msra.mxu0 %v1062
      %1069 = vmatprep.subr.bf16.mxu0 0
      %1070 = vmatpush1.bf16.msra.mxu0 0
      %1071 = vmatprep.subr.bf16.mxu0 0
      %1072 = vmatpush1.bf16.msra.mxu0 0
      %1073 = vmatprep.subr.bf16.mxu0 0
      %1074 = vmatpush1.bf16.msra.mxu0 0
      %1075 = vmatprep.subr.bf16.mxu0 0
      %1076 = vmatpush1.bf16.msra.mxu0 0
      %1077 = vmatprep.subr.bf16.mxu0 0
      %1078 = vmatpush1.bf16.msra.mxu0 0
      %1079 = vmatprep.subr.bf16.mxu0 0
      %1080 = vmatpush1.bf16.msra.mxu0 0
      %1081 = vmatprep.subr.bf16.mxu0 0
      %1082 = vmatpush1.bf16.msra.mxu0 0
      %1083 = vmatprep.subr.bf16.mxu0 0
      %1084 = vmatpush1.bf16.msra.mxu0 0
      %1085 = vmatprep.subr.bf16.mxu0 0
      %1086 = vmatpush1.bf16.msra.mxu0 0
      %1087 = vmatprep.subr.bf16.mxu0 0
      %1088 = vmatpush1.bf16.msra.mxu0 0
      %1089 = vmatprep.subr.bf16.mxu0 0
      %1090 = vmatpush1.bf16.msra.mxu0 0
      %1091 = vmatprep.subr.bf16.mxu0 0
      %1092 = vmatpush1.bf16.msra.mxu0 0
      %1093 = vmatprep.subr.bf16.mxu0 0
      %1094 = vmatpush1.bf16.msra.mxu0 0
      %1095 = vmatprep.subr.bf16.mxu0 0
      %1096 = vmatpush1.bf16.msra.mxu0 0
      %1097 = vmatprep.subr.bf16.mxu0 0
      %1098 = vmatpush1.bf16.msra.mxu0 0
      %1099 = vmatprep.mubr.bf16.mxu0 0
      %1100 = vmatmul.mubr.bf16.gmra.mrb[0].mxu0 %v1059
      %v1101 = vpop.f32.mrb[0].mxu0
      %v1102 = vadd.f32 0.0, %v1101
      %v1103 = vpop.f32.mrb[0].mxu0
      %v1104 = vadd.f32 0.0, %v1103
      %v1105 = vpop.f32.mrb[0].mxu0
      %v1106 = vpop.f32.mrb[0].mxu0
      %1107 = vdwg.mxu0
      %v1108 = vadd.f32 %v1027, %v1102
      %v1109 = vadd.f32 %v1028, %v1104
      %v1110 = vmax.f32 %v1108, 0.0
      %v1111 = vmax.f32 %v1109, 0.0
      %v1114 = vcombine.low %v1110, %v1111
      %1116 = vst [vmem:[#allocation2] sm:$0xff] %v1114
      %s1117 = sadd.s32 %s22, 1
      %p1118 = scmp.lt.s32.totalorder %s1117, 0
      %s1119 = ssub.s32 0, %s1117
      %s1120 = scalar_select %p1118, %s1119, %s1117
      %s1121 = sand.u32 %s1120, 1
      %s1122 = ssub.s32 0, %s1121
      %s1123 = scalar_select %p1118, %s1122, %s1121
      %p1124 = scmp.ne.s32.totalorder %s1123, 0
      %p1125 = scmp.lt.s32.totalorder %s1123, 0
      %p1126 = pnand %p1125, %p1124
      %p1127 = pneg %p1126
      %s1128 = sadd.s32 %s1123, 2
      %s1129 = scalar_select %p1127, %s1128, %s1123
      %p1130 = scmp.eq.s32.totalorder %s1129, 0
      // Predicated region
      $region49: #{block_forward.1} parent=43 // pred_check
        %p1131 = pneg %p1130
      $region50: #{block_forward.1} parent=43 // pred_check_branch
        %1133 = sbr.rel (%p1131) target = $region52
      $region51: #{block_forward.1} parent=43 // pred_region
        %v1134 = vld [vmem:[#allocation2] sm:$0xff]
        %v1135 = vld [vmem:[%s316] sm:$0xff]
        %v1136 = vadd.f32 %v1134, %v1135
        %1137 = vst [vmem:[#allocation2] sm:$0xff] %v1136
      $region52: #{block_forward.1} parent=43 // pred_fallthru
        _
      %p1138 = scmp.eq.s32.totalorder %s22, 3
      // Predicated region
      $region53: #{block_forward.1} parent=43 // pred_check
        %p1139 = pneg %p1138
      $region54: #{block_forward.1} parent=43 // pred_check_branch
        %1141 = sbr.rel (%p1139) target = $region56
      $region55: #{block_forward.1} parent=43 // pred_region
        %v1142 = vld [vmem:[#allocation2] sm:$0xff]
        %1143 = vst [vmem:[%s340] sm:$0xff] %v1142
      $region56: #{block_forward.1} parent=43 // pred_fallthru
        _
      %p1144 = scmp.lt.s32.totalorder %s21, 1
      %s1145 = scalar_select %p1144, %s21, 1
      %s1146 = smul.addr %s1145, 2
      %s1147 = smul.addr %s1146, 4
      %s1148 = scalar_lea.vmem %s6, %s1147
      // Predicated region
      $region57: #{block_forward.1} parent=43 // pred_check
        %p1149 = pneg %p198
      $region58: #{block_forward.1} parent=43 // pred_check_branch
        %1151 = sbr.rel (%p1149) target = $region60
      $region59: #{block_forward.1} parent=43 // pred_region
        _
      $region60: #{block_forward.1} parent=43 // pred_fallthru
        _
    $region44: #{block_forward.1} parent=5 // pred_fallthru
      _
    %p1152 = scmp.le.s32.totalorder 2, %s12
    // Predicated region
    $region61: #{block_forward.1} parent=5 // pred_check
      %p1153 = pneg %p1152
    $region62: #{block_forward.1} parent=5 // pred_check_branch
      %1155 = sbr.rel (%p1153) target = $region64
    $region63: #{block_forward.1} parent=5 // pred_region
      %s1156 = ssub.s32 %s12, 2
      // Predicated region
      $region65: #{block_forward.1} parent=63 // pred_check
        %p1157 = pneg %p204
      $region66: #{block_forward.1} parent=63 // pred_check_branch
        %1159 = sbr.rel (%p1157) target = $region68
      $region67: #{block_forward.1} parent=63 // pred_region
        %p1160 = scmp.lt.s32.totalorder %s23, 1
        %s1161 = scalar_select %p1160, %s23, 1
        %s1162 = smul.addr %s1161, 2
        %s1163 = smul.addr %s1162, 4
        %s1164 = scalar_lea.vmem %s6, %s1163
      $region68: #{block_forward.1} parent=63 // pred_fallthru
        _
    $region64: #{block_forward.1} parent=5 // pred_fallthru
      _
  $region6: #{block_forward.1} parent=0 // loop_footer
    %s16 = sadd.s32 1, %s12
  $region7: #{block_forward.1} parent=0 // loop_footer_branch
    %11 = sbr.rel target = $region3
  $region8: #{block_forward.1} parent=0 // loop_exit
    _

</llo_original>
